<compile_context>
chip_gen: v5e
topology: v5e:2x2
jax: 0.10.0
libtpu: 0.0.40
codegen_flags: <defaults>
</compile_context>

<pallas_src>
import functools

import jax
import jax.numpy as jnp
import numpy as np
from jax import lax
from jax.experimental import pallas as pl
from jax.experimental.pallas import tpu as pltpu

_SUBLANE = 8    # f32 sublane tile
_LANE = 128     # lane tile


def _round_up(n, m):
    return ((n + m - 1) // m) * m


def _rnn_brain_kernel(x2d_ref, wih_ref, whh_ref, brnn_ref, wfc_ref, bfc_ref,
                      out_ref, hs_ref, *, seq, batch, batch_pad, hidden):
    hidden_pad = whh_ref.shape[1]
    act_pad = wfc_ref.shape[1]
    rows = seq * batch_pad

    # ---- Hoisted input projection: one bulk MXU matmul, RNN biases folded. ---
    # hs_ref doubles as the XW buffer and, after the loop, the hidden-state buffer.
    hs_ref[...] = (jnp.dot(x2d_ref[...], wih_ref[...],
                           preferred_element_type=jnp.float32)
                   + brnn_ref[...])                        # (rows, hidden_pad)

    use_vpu = hidden <= 32
    if use_vpu:
        hrows = _round_up(hidden, _SUBLANE)
        whh = whh_ref[0:hrows, :]          # (hrows, hidden_pad), kept in vregs
    else:
        whh = whh_ref[...]                 # (hidden_pad, hidden_pad)

    # ---- Serial recurrence: only the h-dependent part is on the critical path.
    def step(t, h):
        r0 = pl.multiple_of(t * batch_pad, _SUBLANE)       # sublane-aligned block
        pre = hs_ref[pl.ds(r0, batch_pad), :]              # lane-dense load
        if use_vpu:
            # h @ W_hh as `hidden` broadcast FMAs on the VPU -- avoids an MXU
            # push / result-FIFO pop round trip on every serial iteration.
            for k in range(hidden):                        # static unroll
                pre = pre + h[:, k:k + 1] * whh[k:k + 1, :]
        else:
            pre = pre + jnp.dot(h, whh, preferred_element_type=jnp.float32)
        h_new = jnp.tanh(pre)
        hs_ref[pl.ds(r0, batch_pad), :] = h_new            # overwrite consumed slice
        return h_new

    h0 = jnp.zeros((batch_pad, hidden_pad), jnp.float32)
    lax.fori_loop(0, seq, step, h0, unroll=(True if seq <= 16 else 8))

    # ---- Hoisted FC + global abs-normalization + lane-dense bulk store. -----
    y = (jnp.dot(hs_ref[...], wfc_ref[...], preferred_element_type=jnp.float32)
         + bfc_ref[...])                                   # (rows, act_pad)
    row = lax.broadcasted_iota(jnp.int32, (rows, act_pad), 0)
    a = jnp.where((row % batch_pad) < batch, jnp.abs(y), 0.0)   # mask padded rows
    total = jnp.sum(a, keepdims=True)                      # (1, 1) f32
    inv = pl.reciprocal(total, approx=True)                # EUP slot
    inv = inv * (2.0 - total * inv)                        # one Newton step
    out_ref[...] = a * inv


def rnn_brain_forward(x, w_ih, w_hh, b_ih, b_hh, w_fc, b_fc):
    """x: (seq, batch, obs). Weights in PyTorch convention:
       w_ih (hidden, obs), w_hh (hidden, hidden), w_fc (act, hidden)."""
    seq, batch, obs = x.shape
    hidden = w_hh.shape[0]
    act = w_fc.shape[0]
    batch_pad = _round_up(batch, _SUBLANE)
    hidden_pad = _round_up(hidden, _LANE)
    act_pad = _round_up(act, _LANE)
    rows = seq * batch_pad

    # Host glue: pad batch to the sublane tile and hidden/act to the lane tile so
    # every in-kernel load/store/matmul is tile-aligned and lane-dense. Padded
    # weight/bias entries are zero, so padded lanes stay exactly zero end-to-end
    # and do not perturb the global abs-sum.
    x = jnp.asarray(x, jnp.float32)
    x2d = (jnp.zeros((seq, batch_pad, obs), jnp.float32)
           .at[:, :batch, :].set(x).reshape(rows, obs))
    wih_p = (jnp.zeros((obs, hidden_pad), jnp.float32)
             .at[:, :hidden].set(jnp.asarray(w_ih, jnp.float32).T))
    whh_p = (jnp.zeros((hidden_pad, hidden_pad), jnp.float32)
             .at[:hidden, :hidden].set(jnp.asarray(w_hh, jnp.float32).T))
    brnn_p = (jnp.zeros((1, hidden_pad), jnp.float32)
              .at[0, :hidden].set(jnp.asarray(b_ih, jnp.float32)
                                  + jnp.asarray(b_hh, jnp.float32)))
    wfc_p = (jnp.zeros((hidden_pad, act_pad), jnp.float32)
             .at[:hidden, :act].set(jnp.asarray(w_fc, jnp.float32).T))
    bfc_p = (jnp.zeros((1, act_pad), jnp.float32)
             .at[0, :act].set(jnp.asarray(b_fc, jnp.float32)))

    # VMEM budget and cost estimate from the actual (tile-padded f32) buffers.
    def pb(shape):
        return _round_up(shape[0], _SUBLANE) * _round_up(shape[1], _LANE) * 4
    vmem_need = (pb((rows, obs)) + pb((obs, hidden_pad))
                 + pb((hidden_pad, hidden_pad)) + pb((1, hidden_pad))
                 + pb((hidden_pad, act_pad)) + pb((1, act_pad))
                 + pb((rows, hidden_pad))            # shared XW/H scratch
                 + pb((rows, act_pad)))              # output
    # v7x has only 64 MiB physical VMEM -- leave headroom below ~56 MiB.
    vmem_limit = int(min(max(2 * vmem_need + (4 << 20), 32 << 20), 56 << 20))
    flops = (2 * rows * obs * hidden_pad
             + seq * 2 * batch_pad * hidden * hidden_pad
             + 2 * rows * hidden_pad * act_pad
             + 4 * rows * act_pad)
    cost = pl.CostEstimate(flops=flops, transcendentals=rows * hidden_pad,
                           bytes_accessed=vmem_need)

    kernel = functools.partial(_rnn_brain_kernel, seq=seq, batch=batch,
                               batch_pad=batch_pad, hidden=hidden)
    vmem = pl.BlockSpec(memory_space=pltpu.MemorySpace.VMEM)
    out2d = pl.pallas_call(
        kernel,
        out_shape=jax.ShapeDtypeStruct((rows, act_pad), jnp.float32),
        in_specs=[vmem] * 6,
        out_specs=vmem,
        scratch_shapes=[pltpu.VMEM((rows, hidden_pad), jnp.float32)],  # XW/H shared
        compiler_params=pltpu.CompilerParams(vmem_limit_bytes=vmem_limit),
        cost_estimate=cost,
    )(x2d, wih_p, whh_p, brnn_p, wfc_p, bfc_p)
    # TODO(synk): for large seq*batch, add a seq-chunked grid (persistent-h VMEM
    # scratch, chunk axis "arbitrary", per-chunk partial |y| sums + a follow-up
    # scale pass), a leading "parallel" batch-group axis for v7x's 2nd core, and
    # optionally bf16 inputs for the two bulk matmuls on v6e/v7x (relax tolerance).
    return out2d.reshape(seq, batch_pad, act_pad)[:, :batch, :act]


def _reference(x, w_ih, w_hh, b_ih, b_hh, w_fc, b_fc):
    seq, batch, _ = x.shape
    hidden = w_hh.shape[0]
    h = jnp.zeros((batch, hidden), jnp.float32)
    ys = []
    for t in range(seq):
        h = jnp.tanh(x[t] @ w_ih.T + h @ w_hh.T + b_ih + b_hh)
        ys.append(h @ w_fc.T + b_fc)
    y = jnp.stack(ys, axis=0)
    a = jnp.abs(y)
    return a / jnp.sum(a)


if __name__ == "__main__":
    # Small shapes consistent with the module (rnn_units=8 default).
    OBS, ACT, HID = 16, 4, 8
    SEQ, BATCH = 8, 2

    key = jax.random.PRNGKey(0)
    ks = jax.random.split(key, 8)
    bound_rnn = 1.0 / np.sqrt(HID)
    bound_fc = 1.0 / np.sqrt(HID)

    x = jax.random.normal(ks[0], (SEQ, BATCH, OBS), jnp.float32)
    w_ih = jax.random.uniform(ks[1], (HID, OBS), jnp.float32, -bound_rnn, bound_rnn)
    w_hh = jax.random.uniform(ks[2], (HID, HID), jnp.float32, -bound_rnn, bound_rnn)
    b_ih = jax.random.uniform(ks[3], (HID,), jnp.float32, -bound_rnn, bound_rnn)
    b_hh = jax.random.uniform(ks[4], (HID,), jnp.float32, -bound_rnn, bound_rnn)
    w_fc = jax.random.uniform(ks[5], (ACT, HID), jnp.float32, -bound_fc, bound_fc)
    b_fc = jax.random.uniform(ks[6], (ACT,), jnp.float32, -bound_fc, bound_fc)

    out = rnn_brain_forward(x, w_ih, w_hh, b_ih, b_hh, w_fc, b_fc)
    out = jax.block_until_ready(out)

    ref = _reference(x, w_ih, w_hh, b_ih, b_hh, w_fc, b_fc)
    assert out.shape == (SEQ, BATCH, ACT)
    assert np.allclose(np.asarray(out), np.asarray(ref), atol=1e-5, rtol=1e-5)
    print("KERNEL_OK")
</pallas_src>

<mosaic_0001>
module attributes {stable_mosaic.version = 11 : i64} {
  func.func @_rnn_brain_kernel(%arg0: memref<64x16xf32, #tpu.memory_space<vmem>>, %arg1: memref<16x128xf32, #tpu.memory_space<vmem>>, %arg2: memref<128x128xf32, #tpu.memory_space<vmem>>, %arg3: memref<1x128xf32, #tpu.memory_space<vmem>>, %arg4: memref<128x128xf32, #tpu.memory_space<vmem>>, %arg5: memref<1x128xf32, #tpu.memory_space<vmem>>, %arg6: memref<64x128xf32, #tpu.memory_space<vmem>>, %arg7: memref<64x128xf32, #tpu.memory_space<vmem>>) attributes {dimension_semantics = [], scalar_prefetch = 0 : i64, scratch_operands = 1 : i64, tpu.core_type = #tpu.core_type<tc>} {
    %c0 = arith.constant 0 : index
    %c0_0 = arith.constant 0 : index
    %0 = vector.load %arg0[%c0, %c0_0] : memref<64x16xf32, #tpu.memory_space<vmem>>, vector<64x16xf32>
    %c0_1 = arith.constant 0 : index
    %c0_2 = arith.constant 0 : index
    %1 = vector.load %arg1[%c0_1, %c0_2] : memref<16x128xf32, #tpu.memory_space<vmem>>, vector<16x128xf32>
    %cst = arith.constant dense<0.000000e+00> : vector<64x128xf32>
    %2 = tpu.matmul %0, %1, %cst {dimension_numbers = #tpu.dot_dimension_numbers<[1], [0], [0], [1], [0, 0, 1, 1], [], []>} : vector<64x16xf32>, vector<16x128xf32>, vector<64x128xf32> -> vector<64x128xf32>
    %c0_3 = arith.constant 0 : index
    %c0_4 = arith.constant 0 : index
    %3 = vector.load %arg3[%c0_3, %c0_4] : memref<1x128xf32, #tpu.memory_space<vmem>>, vector<1x128xf32>
    %4 = vector.broadcast %3 : vector<1x128xf32> to vector<64x128xf32>
    %5 = arith.addf %2, %4 : vector<64x128xf32>
    %c0_5 = arith.constant 0 : index
    %c0_6 = arith.constant 0 : index
    %6 = vector.load %arg7[%c0_5, %c0_6] : memref<64x128xf32, #tpu.memory_space<vmem>>, vector<64x128xf32>
    tpu.vector_store %arg7[%c0_5, %c0_6], %5 {strides = array<i32>} : memref<64x128xf32, #tpu.memory_space<vmem>>, vector<64x128xf32>,
    %c0_7 = arith.constant 0 : index
    %c0_8 = arith.constant 0 : index
    %7 = vector.load %arg2[%c0_7, %c0_8] : memref<128x128xf32, #tpu.memory_space<vmem>>, vector<8x128xf32>
    %cst_9 = arith.constant 0.000000e+00 : f32
    %8 = vector.broadcast %cst_9 : f32 to vector<8x128xf32>
    %c0_i32 = arith.constant 0 : i32
    %c8_i32 = arith.constant 8 : i32
    %9 = arith.muli %c0_i32, %c8_i32 : i32
    %10 = tpu.assume_multiple %9, 8 : i32
    %11 = arith.index_cast %10 : i32 to index
    %c0_10 = arith.constant 0 : index
    %12 = vector.load %arg7[%11, %c0_10] : memref<64x128xf32, #tpu.memory_space<vmem>>, vector<8x128xf32>
    %13 = vector.extract_strided_slice %8 {offsets = [0, 0], sizes = [8, 1], strides = [1, 1]} : vector<8x128xf32> to vector<8x1xf32>
    %14 = vector.extract_strided_slice %7 {offsets = [0, 0], sizes = [1, 128], strides = [1, 1]} : vector<8x128xf32> to vector<1x128xf32>
    %15 = vector.broadcast %13 : vector<8x1xf32> to vector<8x128xf32>
    %16 = vector.broadcast %14 : vector<1x128xf32> to vector<8x128xf32>
    %17 = arith.mulf %15, %16 : vector<8x128xf32>
    %18 = arith.addf %12, %17 : vector<8x128xf32>
    %19 = vector.extract_strided_slice %8 {offsets = [0, 1], sizes = [8, 1], strides = [1, 1]} : vector<8x128xf32> to vector<8x1xf32>
    %20 = vector.extract_strided_slice %7 {offsets = [1, 0], sizes = [1, 128], strides = [1, 1]} : vector<8x128xf32> to vector<1x128xf32>
    %21 = vector.broadcast %19 : vector<8x1xf32> to vector<8x128xf32>
    %22 = vector.broadcast %20 : vector<1x128xf32> to vector<8x128xf32>
    %23 = arith.mulf %21, %22 : vector<8x128xf32>
    %24 = arith.addf %18, %23 : vector<8x128xf32>
    %25 = vector.extract_strided_slice %8 {offsets = [0, 2], sizes = [8, 1], strides = [1, 1]} : vector<8x128xf32> to vector<8x1xf32>
    %26 = vector.extract_strided_slice %7 {offsets = [2, 0], sizes = [1, 128], strides = [1, 1]} : vector<8x128xf32> to vector<1x128xf32>
    %27 = vector.broadcast %25 : vector<8x1xf32> to vector<8x128xf32>
    %28 = vector.broadcast %26 : vector<1x128xf32> to vector<8x128xf32>
    %29 = arith.mulf %27, %28 : vector<8x128xf32>
    %30 = arith.addf %24, %29 : vector<8x128xf32>
    %31 = vector.extract_strided_slice %8 {offsets = [0, 3], sizes = [8, 1], strides = [1, 1]} : vector<8x128xf32> to vector<8x1xf32>
    %32 = vector.extract_strided_slice %7 {offsets = [3, 0], sizes = [1, 128], strides = [1, 1]} : vector<8x128xf32> to vector<1x128xf32>
    %33 = vector.broadcast %31 : vector<8x1xf32> to vector<8x128xf32>
    %34 = vector.broadcast %32 : vector<1x128xf32> to vector<8x128xf32>
    %35 = arith.mulf %33, %34 : vector<8x128xf32>
    %36 = arith.addf %30, %35 : vector<8x128xf32>
    %37 = vector.extract_strided_slice %8 {offsets = [0, 4], sizes = [8, 1], strides = [1, 1]} : vector<8x128xf32> to vector<8x1xf32>
    %38 = vector.extract_strided_slice %7 {offsets = [4, 0], sizes = [1, 128], strides = [1, 1]} : vector<8x128xf32> to vector<1x128xf32>
    %39 = vector.broadcast %37 : vector<8x1xf32> to vector<8x128xf32>
    %40 = vector.broadcast %38 : vector<1x128xf32> to vector<8x128xf32>
    %41 = arith.mulf %39, %40 : vector<8x128xf32>
    %42 = arith.addf %36, %41 : vector<8x128xf32>
    %43 = vector.extract_strided_slice %8 {offsets = [0, 5], sizes = [8, 1], strides = [1, 1]} : vector<8x128xf32> to vector<8x1xf32>
    %44 = vector.extract_strided_slice %7 {offsets = [5, 0], sizes = [1, 128], strides = [1, 1]} : vector<8x128xf32> to vector<1x128xf32>
    %45 = vector.broadcast %43 : vector<8x1xf32> to vector<8x128xf32>
    %46 = vector.broadcast %44 : vector<1x128xf32> to vector<8x128xf32>
    %47 = arith.mulf %45, %46 : vector<8x128xf32>
    %48 = arith.addf %42, %47 : vector<8x128xf32>
    %49 = vector.extract_strided_slice %8 {offsets = [0, 6], sizes = [8, 1], strides = [1, 1]} : vector<8x128xf32> to vector<8x1xf32>
    %50 = vector.extract_strided_slice %7 {offsets = [6, 0], sizes = [1, 128], strides = [1, 1]} : vector<8x128xf32> to vector<1x128xf32>
    %51 = vector.broadcast %49 : vector<8x1xf32> to vector<8x128xf32>
    %52 = vector.broadcast %50 : vector<1x128xf32> to vector<8x128xf32>
    %53 = arith.mulf %51, %52 : vector<8x128xf32>
    %54 = arith.addf %48, %53 : vector<8x128xf32>
    %55 = vector.extract_strided_slice %8 {offsets = [0, 7], sizes = [8, 1], strides = [1, 1]} : vector<8x128xf32> to vector<8x1xf32>
    %56 = vector.extract_strided_slice %7 {offsets = [7, 0], sizes = [1, 128], strides = [1, 1]} : vector<8x128xf32> to vector<1x128xf32>
    %57 = vector.broadcast %55 : vector<8x1xf32> to vector<8x128xf32>
    %58 = vector.broadcast %56 : vector<1x128xf32> to vector<8x128xf32>
    %59 = arith.mulf %57, %58 : vector<8x128xf32>
    %60 = arith.addf %54, %59 : vector<8x128xf32>
    %61 = math.tanh %60 : vector<8x128xf32>
    %62 = arith.index_cast %10 : i32 to index
    %c0_11 = arith.constant 0 : index
    %63 = vector.load %arg7[%62, %c0_11] : memref<64x128xf32, #tpu.memory_space<vmem>>, vector<8x128xf32>
    tpu.vector_store %arg7[%62, %c0_11], %61 {strides = array<i32>} : memref<64x128xf32, #tpu.memory_space<vmem>>, vector<8x128xf32>,
    %c1_i32 = arith.constant 1 : i32
    %c8_i32_12 = arith.constant 8 : i32
    %64 = arith.muli %c1_i32, %c8_i32_12 : i32
    %65 = tpu.assume_multiple %64, 8 : i32
    %66 = arith.index_cast %65 : i32 to index
    %c0_13 = arith.constant 0 : index
    %67 = vector.load %arg7[%66, %c0_13] : memref<64x128xf32, #tpu.memory_space<vmem>>, vector<8x128xf32>
    %68 = vector.extract_strided_slice %61 {offsets = [0, 0], sizes = [8, 1], strides = [1, 1]} : vector<8x128xf32> to vector<8x1xf32>
    %69 = vector.extract_strided_slice %7 {offsets = [0, 0], sizes = [1, 128], strides = [1, 1]} : vector<8x128xf32> to vector<1x128xf32>
    %70 = vector.broadcast %68 : vector<8x1xf32> to vector<8x128xf32>
    %71 = vector.broadcast %69 : vector<1x128xf32> to vector<8x128xf32>
    %72 = arith.mulf %70, %71 : vector<8x128xf32>
    %73 = arith.addf %67, %72 : vector<8x128xf32>
    %74 = vector.extract_strided_slice %61 {offsets = [0, 1], sizes = [8, 1], strides = [1, 1]} : vector<8x128xf32> to vector<8x1xf32>
    %75 = vector.extract_strided_slice %7 {offsets = [1, 0], sizes = [1, 128], strides = [1, 1]} : vector<8x128xf32> to vector<1x128xf32>
    %76 = vector.broadcast %74 : vector<8x1xf32> to vector<8x128xf32>
    %77 = vector.broadcast %75 : vector<1x128xf32> to vector<8x128xf32>
    %78 = arith.mulf %76, %77 : vector<8x128xf32>
    %79 = arith.addf %73, %78 : vector<8x128xf32>
    %80 = vector.extract_strided_slice %61 {offsets = [0, 2], sizes = [8, 1], strides = [1, 1]} : vector<8x128xf32> to vector<8x1xf32>
    %81 = vector.extract_strided_slice %7 {offsets = [2, 0], sizes = [1, 128], strides = [1, 1]} : vector<8x128xf32> to vector<1x128xf32>
    %82 = vector.broadcast %80 : vector<8x1xf32> to vector<8x128xf32>
    %83 = vector.broadcast %81 : vector<1x128xf32> to vector<8x128xf32>
    %84 = arith.mulf %82, %83 : vector<8x128xf32>
    %85 = arith.addf %79, %84 : vector<8x128xf32>
    %86 = vector.extract_strided_slice %61 {offsets = [0, 3], sizes = [8, 1], strides = [1, 1]} : vector<8x128xf32> to vector<8x1xf32>
    %87 = vector.extract_strided_slice %7 {offsets = [3, 0], sizes = [1, 128], strides = [1, 1]} : vector<8x128xf32> to vector<1x128xf32>
    %88 = vector.broadcast %86 : vector<8x1xf32> to vector<8x128xf32>
    %89 = vector.broadcast %87 : vector<1x128xf32> to vector<8x128xf32>
    %90 = arith.mulf %88, %89 : vector<8x128xf32>
    %91 = arith.addf %85, %90 : vector<8x128xf32>
    %92 = vector.extract_strided_slice %61 {offsets = [0, 4], sizes = [8, 1], strides = [1, 1]} : vector<8x128xf32> to vector<8x1xf32>
    %93 = vector.extract_strided_slice %7 {offsets = [4, 0], sizes = [1, 128], strides = [1, 1]} : vector<8x128xf32> to vector<1x128xf32>
    %94 = vector.broadcast %92 : vector<8x1xf32> to vector<8x128xf32>
    %95 = vector.broadcast %93 : vector<1x128xf32> to vector<8x128xf32>
    %96 = arith.mulf %94, %95 : vector<8x128xf32>
    %97 = arith.addf %91, %96 : vector<8x128xf32>
    %98 = vector.extract_strided_slice %61 {offsets = [0, 5], sizes = [8, 1], strides = [1, 1]} : vector<8x128xf32> to vector<8x1xf32>
    %99 = vector.extract_strided_slice %7 {offsets = [5, 0], sizes = [1, 128], strides = [1, 1]} : vector<8x128xf32> to vector<1x128xf32>
    %100 = vector.broadcast %98 : vector<8x1xf32> to vector<8x128xf32>
    %101 = vector.broadcast %99 : vector<1x128xf32> to vector<8x128xf32>
    %102 = arith.mulf %100, %101 : vector<8x128xf32>
    %103 = arith.addf %97, %102 : vector<8x128xf32>
    %104 = vector.extract_strided_slice %61 {offsets = [0, 6], sizes = [8, 1], strides = [1, 1]} : vector<8x128xf32> to vector<8x1xf32>
    %105 = vector.extract_strided_slice %7 {offsets = [6, 0], sizes = [1, 128], strides = [1, 1]} : vector<8x128xf32> to vector<1x128xf32>
    %106 = vector.broadcast %104 : vector<8x1xf32> to vector<8x128xf32>
    %107 = vector.broadcast %105 : vector<1x128xf32> to vector<8x128xf32>
    %108 = arith.mulf %106, %107 : vector<8x128xf32>
    %109 = arith.addf %103, %108 : vector<8x128xf32>
    %110 = vector.extract_strided_slice %61 {offsets = [0, 7], sizes = [8, 1], strides = [1, 1]} : vector<8x128xf32> to vector<8x1xf32>
    %111 = vector.extract_strided_slice %7 {offsets = [7, 0], sizes = [1, 128], strides = [1, 1]} : vector<8x128xf32> to vector<1x128xf32>
    %112 = vector.broadcast %110 : vector<8x1xf32> to vector<8x128xf32>
    %113 = vector.broadcast %111 : vector<1x128xf32> to vector<8x128xf32>
    %114 = arith.mulf %112, %113 : vector<8x128xf32>
    %115 = arith.addf %109, %114 : vector<8x128xf32>
    %116 = math.tanh %115 : vector<8x128xf32>
    %117 = arith.index_cast %65 : i32 to index
    %c0_14 = arith.constant 0 : index
    %118 = vector.load %arg7[%117, %c0_14] : memref<64x128xf32, #tpu.memory_space<vmem>>, vector<8x128xf32>
    tpu.vector_store %arg7[%117, %c0_14], %116 {strides = array<i32>} : memref<64x128xf32, #tpu.memory_space<vmem>>, vector<8x128xf32>,
    %c2_i32 = arith.constant 2 : i32
    %c8_i32_15 = arith.constant 8 : i32
    %119 = arith.muli %c2_i32, %c8_i32_15 : i32
    %120 = tpu.assume_multiple %119, 8 : i32
    %121 = arith.index_cast %120 : i32 to index
    %c0_16 = arith.constant 0 : index
    %122 = vector.load %arg7[%121, %c0_16] : memref<64x128xf32, #tpu.memory_space<vmem>>, vector<8x128xf32>
    %123 = vector.extract_strided_slice %116 {offsets = [0, 0], sizes = [8, 1], strides = [1, 1]} : vector<8x128xf32> to vector<8x1xf32>
    %124 = vector.extract_strided_slice %7 {offsets = [0, 0], sizes = [1, 128], strides = [1, 1]} : vector<8x128xf32> to vector<1x128xf32>
    %125 = vector.broadcast %123 : vector<8x1xf32> to vector<8x128xf32>
    %126 = vector.broadcast %124 : vector<1x128xf32> to vector<8x128xf32>
    %127 = arith.mulf %125, %126 : vector<8x128xf32>
    %128 = arith.addf %122, %127 : vector<8x128xf32>
    %129 = vector.extract_strided_slice %116 {offsets = [0, 1], sizes = [8, 1], strides = [1, 1]} : vector<8x128xf32> to vector<8x1xf32>
    %130 = vector.extract_strided_slice %7 {offsets = [1, 0], sizes = [1, 128], strides = [1, 1]} : vector<8x128xf32> to vector<1x128xf32>
    %131 = vector.broadcast %129 : vector<8x1xf32> to vector<8x128xf32>
    %132 = vector.broadcast %130 : vector<1x128xf32> to vector<8x128xf32>
    %133 = arith.mulf %131, %132 : vector<8x128xf32>
    %134 = arith.addf %128, %133 : vector<8x128xf32>
    %135 = vector.extract_strided_slice %116 {offsets = [0, 2], sizes = [8, 1], strides = [1, 1]} : vector<8x128xf32> to vector<8x1xf32>
    %136 = vector.extract_strided_slice %7 {offsets = [2, 0], sizes = [1, 128], strides = [1, 1]} : vector<8x128xf32> to vector<1x128xf32>
    %137 = vector.broadcast %135 : vector<8x1xf32> to vector<8x128xf32>
    %138 = vector.broadcast %136 : vector<1x128xf32> to vector<8x128xf32>
    %139 = arith.mulf %137, %138 : vector<8x128xf32>
    %140 = arith.addf %134, %139 : vector<8x128xf32>
    %141 = vector.extract_strided_slice %116 {offsets = [0, 3], sizes = [8, 1], strides = [1, 1]} : vector<8x128xf32> to vector<8x1xf32>
    %142 = vector.extract_strided_slice %7 {offsets = [3, 0], sizes = [1, 128], strides = [1, 1]} : vector<8x128xf32> to vector<1x128xf32>
    %143 = vector.broadcast %141 : vector<8x1xf32> to vector<8x128xf32>
    %144 = vector.broadcast %142 : vector<1x128xf32> to vector<8x128xf32>
    %145 = arith.mulf %143, %144 : vector<8x128xf32>
    %146 = arith.addf %140, %145 : vector<8x128xf32>
    %147 = vector.extract_strided_slice %116 {offsets = [0, 4], sizes = [8, 1], strides = [1, 1]} : vector<8x128xf32> to vector<8x1xf32>
    %148 = vector.extract_strided_slice %7 {offsets = [4, 0], sizes = [1, 128], strides = [1, 1]} : vector<8x128xf32> to vector<1x128xf32>
    %149 = vector.broadcast %147 : vector<8x1xf32> to vector<8x128xf32>
    %150 = vector.broadcast %148 : vector<1x128xf32> to vector<8x128xf32>
    %151 = arith.mulf %149, %150 : vector<8x128xf32>
    %152 = arith.addf %146, %151 : vector<8x128xf32>
    %153 = vector.extract_strided_slice %116 {offsets = [0, 5], sizes = [8, 1], strides = [1, 1]} : vector<8x128xf32> to vector<8x1xf32>
    %154 = vector.extract_strided_slice %7 {offsets = [5, 0], sizes = [1, 128], strides = [1, 1]} : vector<8x128xf32> to vector<1x128xf32>
    %155 = vector.broadcast %153 : vector<8x1xf32> to vector<8x128xf32>
    %156 = vector.broadcast %154 : vector<1x128xf32> to vector<8x128xf32>
    %157 = arith.mulf %155, %156 : vector<8x128xf32>
    %158 = arith.addf %152, %157 : vector<8x128xf32>
    %159 = vector.extract_strided_slice %116 {offsets = [0, 6], sizes = [8, 1], strides = [1, 1]} : vector<8x128xf32> to vector<8x1xf32>
    %160 = vector.extract_strided_slice %7 {offsets = [6, 0], sizes = [1, 128], strides = [1, 1]} : vector<8x128xf32> to vector<1x128xf32>
    %161 = vector.broadcast %159 : vector<8x1xf32> to vector<8x128xf32>
    %162 = vector.broadcast %160 : vector<1x128xf32> to vector<8x128xf32>
    %163 = arith.mulf %161, %162 : vector<8x128xf32>
    %164 = arith.addf %158, %163 : vector<8x128xf32>
    %165 = vector.extract_strided_slice %116 {offsets = [0, 7], sizes = [8, 1], strides = [1, 1]} : vector<8x128xf32> to vector<8x1xf32>
    %166 = vector.extract_strided_slice %7 {offsets = [7, 0], sizes = [1, 128], strides = [1, 1]} : vector<8x128xf32> to vector<1x128xf32>
    %167 = vector.broadcast %165 : vector<8x1xf32> to vector<8x128xf32>
    %168 = vector.broadcast %166 : vector<1x128xf32> to vector<8x128xf32>
    %169 = arith.mulf %167, %168 : vector<8x128xf32>
    %170 = arith.addf %164, %169 : vector<8x128xf32>
    %171 = math.tanh %170 : vector<8x128xf32>
    %172 = arith.index_cast %120 : i32 to index
    %c0_17 = arith.constant 0 : index
    %173 = vector.load %arg7[%172, %c0_17] : memref<64x128xf32, #tpu.memory_space<vmem>>, vector<8x128xf32>
    tpu.vector_store %arg7[%172, %c0_17], %171 {strides = array<i32>} : memref<64x128xf32, #tpu.memory_space<vmem>>, vector<8x128xf32>,
    %c3_i32 = arith.constant 3 : i32
    %c8_i32_18 = arith.constant 8 : i32
    %174 = arith.muli %c3_i32, %c8_i32_18 : i32
    %175 = tpu.assume_multiple %174, 8 : i32
    %176 = arith.index_cast %175 : i32 to index
    %c0_19 = arith.constant 0 : index
    %177 = vector.load %arg7[%176, %c0_19] : memref<64x128xf32, #tpu.memory_space<vmem>>, vector<8x128xf32>
    %178 = vector.extract_strided_slice %171 {offsets = [0, 0], sizes = [8, 1], strides = [1, 1]} : vector<8x128xf32> to vector<8x1xf32>
    %179 = vector.extract_strided_slice %7 {offsets = [0, 0], sizes = [1, 128], strides = [1, 1]} : vector<8x128xf32> to vector<1x128xf32>
    %180 = vector.broadcast %178 : vector<8x1xf32> to vector<8x128xf32>
    %181 = vector.broadcast %179 : vector<1x128xf32> to vector<8x128xf32>
    %182 = arith.mulf %180, %181 : vector<8x128xf32>
    %183 = arith.addf %177, %182 : vector<8x128xf32>
    %184 = vector.extract_strided_slice %171 {offsets = [0, 1], sizes = [8, 1], strides = [1, 1]} : vector<8x128xf32> to vector<8x1xf32>
    %185 = vector.extract_strided_slice %7 {offsets = [1, 0], sizes = [1, 128], strides = [1, 1]} : vector<8x128xf32> to vector<1x128xf32>
    %186 = vector.broadcast %184 : vector<8x1xf32> to vector<8x128xf32>
    %187 = vector.broadcast %185 : vector<1x128xf32> to vector<8x128xf32>
    %188 = arith.mulf %186, %187 : vector<8x128xf32>
    %189 = arith.addf %183, %188 : vector<8x128xf32>
    %190 = vector.extract_strided_slice %171 {offsets = [0, 2], sizes = [8, 1], strides = [1, 1]} : vector<8x128xf32> to vector<8x1xf32>
    %191 = vector.extract_strided_slice %7 {offsets = [2, 0], sizes = [1, 128], strides = [1, 1]} : vector<8x128xf32> to vector<1x128xf32>
    %192 = vector.broadcast %190 : vector<8x1xf32> to vector<8x128xf32>
    %193 = vector.broadcast %191 : vector<1x128xf32> to vector<8x128xf32>
    %194 = arith.mulf %192, %193 : vector<8x128xf32>
    %195 = arith.addf %189, %194 : vector<8x128xf32>
    %196 = vector.extract_strided_slice %171 {offsets = [0, 3], sizes = [8, 1], strides = [1, 1]} : vector<8x128xf32> to vector<8x1xf32>
    %197 = vector.extract_strided_slice %7 {offsets = [3, 0], sizes = [1, 128], strides = [1, 1]} : vector<8x128xf32> to vector<1x128xf32>
    %198 = vector.broadcast %196 : vector<8x1xf32> to vector<8x128xf32>
    %199 = vector.broadcast %197 : vector<1x128xf32> to vector<8x128xf32>
    %200 = arith.mulf %198, %199 : vector<8x128xf32>
    %201 = arith.addf %195, %200 : vector<8x128xf32>
    %202 = vector.extract_strided_slice %171 {offsets = [0, 4], sizes = [8, 1], strides = [1, 1]} : vector<8x128xf32> to vector<8x1xf32>
    %203 = vector.extract_strided_slice %7 {offsets = [4, 0], sizes = [1, 128], strides = [1, 1]} : vector<8x128xf32> to vector<1x128xf32>
    %204 = vector.broadcast %202 : vector<8x1xf32> to vector<8x128xf32>
    %205 = vector.broadcast %203 : vector<1x128xf32> to vector<8x128xf32>
    %206 = arith.mulf %204, %205 : vector<8x128xf32>
    %207 = arith.addf %201, %206 : vector<8x128xf32>
    %208 = vector.extract_strided_slice %171 {offsets = [0, 5], sizes = [8, 1], strides = [1, 1]} : vector<8x128xf32> to vector<8x1xf32>
    %209 = vector.extract_strided_slice %7 {offsets = [5, 0], sizes = [1, 128], strides = [1, 1]} : vector<8x128xf32> to vector<1x128xf32>
    %210 = vector.broadcast %208 : vector<8x1xf32> to vector<8x128xf32>
    %211 = vector.broadcast %209 : vector<1x128xf32> to vector<8x128xf32>
    %212 = arith.mulf %210, %211 : vector<8x128xf32>
    %213 = arith.addf %207, %212 : vector<8x128xf32>
    %214 = vector.extract_strided_slice %171 {offsets = [0, 6], sizes = [8, 1], strides = [1, 1]} : vector<8x128xf32> to vector<8x1xf32>
    %215 = vector.extract_strided_slice %7 {offsets = [6, 0], sizes = [1, 128], strides = [1, 1]} : vector<8x128xf32> to vector<1x128xf32>
    %216 = vector.broadcast %214 : vector<8x1xf32> to vector<8x128xf32>
    %217 = vector.broadcast %215 : vector<1x128xf32> to vector<8x128xf32>
    %218 = arith.mulf %216, %217 : vector<8x128xf32>
    %219 = arith.addf %213, %218 : vector<8x128xf32>
    %220 = vector.extract_strided_slice %171 {offsets = [0, 7], sizes = [8, 1], strides = [1, 1]} : vector<8x128xf32> to vector<8x1xf32>
    %221 = vector.extract_strided_slice %7 {offsets = [7, 0], sizes = [1, 128], strides = [1, 1]} : vector<8x128xf32> to vector<1x128xf32>
    %222 = vector.broadcast %220 : vector<8x1xf32> to vector<8x128xf32>
    %223 = vector.broadcast %221 : vector<1x128xf32> to vector<8x128xf32>
    %224 = arith.mulf %222, %223 : vector<8x128xf32>
    %225 = arith.addf %219, %224 : vector<8x128xf32>
    %226 = math.tanh %225 : vector<8x128xf32>
    %227 = arith.index_cast %175 : i32 to index
    %c0_20 = arith.constant 0 : index
    %228 = vector.load %arg7[%227, %c0_20] : memref<64x128xf32, #tpu.memory_space<vmem>>, vector<8x128xf32>
    tpu.vector_store %arg7[%227, %c0_20], %226 {strides = array<i32>} : memref<64x128xf32, #tpu.memory_space<vmem>>, vector<8x128xf32>,
    %c4_i32 = arith.constant 4 : i32
    %c8_i32_21 = arith.constant 8 : i32
    %229 = arith.muli %c4_i32, %c8_i32_21 : i32
    %230 = tpu.assume_multiple %229, 8 : i32
    %231 = arith.index_cast %230 : i32 to index
    %c0_22 = arith.constant 0 : index
    %232 = vector.load %arg7[%231, %c0_22] : memref<64x128xf32, #tpu.memory_space<vmem>>, vector<8x128xf32>
    %233 = vector.extract_strided_slice %226 {offsets = [0, 0], sizes = [8, 1], strides = [1, 1]} : vector<8x128xf32> to vector<8x1xf32>
    %234 = vector.extract_strided_slice %7 {offsets = [0, 0], sizes = [1, 128], strides = [1, 1]} : vector<8x128xf32> to vector<1x128xf32>
    %235 = vector.broadcast %233 : vector<8x1xf32> to vector<8x128xf32>
    %236 = vector.broadcast %234 : vector<1x128xf32> to vector<8x128xf32>
    %237 = arith.mulf %235, %236 : vector<8x128xf32>
    %238 = arith.addf %232, %237 : vector<8x128xf32>
    %239 = vector.extract_strided_slice %226 {offsets = [0, 1], sizes = [8, 1], strides = [1, 1]} : vector<8x128xf32> to vector<8x1xf32>
    %240 = vector.extract_strided_slice %7 {offsets = [1, 0], sizes = [1, 128], strides = [1, 1]} : vector<8x128xf32> to vector<1x128xf32>
    %241 = vector.broadcast %239 : vector<8x1xf32> to vector<8x128xf32>
    %242 = vector.broadcast %240 : vector<1x128xf32> to vector<8x128xf32>
    %243 = arith.mulf %241, %242 : vector<8x128xf32>
    %244 = arith.addf %238, %243 : vector<8x128xf32>
    %245 = vector.extract_strided_slice %226 {offsets = [0, 2], sizes = [8, 1], strides = [1, 1]} : vector<8x128xf32> to vector<8x1xf32>
    %246 = vector.extract_strided_slice %7 {offsets = [2, 0], sizes = [1, 128], strides = [1, 1]} : vector<8x128xf32> to vector<1x128xf32>
    %247 = vector.broadcast %245 : vector<8x1xf32> to vector<8x128xf32>
    %248 = vector.broadcast %246 : vector<1x128xf32> to vector<8x128xf32>
    %249 = arith.mulf %247, %248 : vector<8x128xf32>
    %250 = arith.addf %244, %249 : vector<8x128xf32>
    %251 = vector.extract_strided_slice %226 {offsets = [0, 3], sizes = [8, 1], strides = [1, 1]} : vector<8x128xf32> to vector<8x1xf32>
    %252 = vector.extract_strided_slice %7 {offsets = [3, 0], sizes = [1, 128], strides = [1, 1]} : vector<8x128xf32> to vector<1x128xf32>
    %253 = vector.broadcast %251 : vector<8x1xf32> to vector<8x128xf32>
    %254 = vector.broadcast %252 : vector<1x128xf32> to vector<8x128xf32>
    %255 = arith.mulf %253, %254 : vector<8x128xf32>
    %256 = arith.addf %250, %255 : vector<8x128xf32>
    %257 = vector.extract_strided_slice %226 {offsets = [0, 4], sizes = [8, 1], strides = [1, 1]} : vector<8x128xf32> to vector<8x1xf32>
    %258 = vector.extract_strided_slice %7 {offsets = [4, 0], sizes = [1, 128], strides = [1, 1]} : vector<8x128xf32> to vector<1x128xf32>
    %259 = vector.broadcast %257 : vector<8x1xf32> to vector<8x128xf32>
    %260 = vector.broadcast %258 : vector<1x128xf32> to vector<8x128xf32>
    %261 = arith.mulf %259, %260 : vector<8x128xf32>
    %262 = arith.addf %256, %261 : vector<8x128xf32>
    %263 = vector.extract_strided_slice %226 {offsets = [0, 5], sizes = [8, 1], strides = [1, 1]} : vector<8x128xf32> to vector<8x1xf32>
    %264 = vector.extract_strided_slice %7 {offsets = [5, 0], sizes = [1, 128], strides = [1, 1]} : vector<8x128xf32> to vector<1x128xf32>
    %265 = vector.broadcast %263 : vector<8x1xf32> to vector<8x128xf32>
    %266 = vector.broadcast %264 : vector<1x128xf32> to vector<8x128xf32>
    %267 = arith.mulf %265, %266 : vector<8x128xf32>
    %268 = arith.addf %262, %267 : vector<8x128xf32>
    %269 = vector.extract_strided_slice %226 {offsets = [0, 6], sizes = [8, 1], strides = [1, 1]} : vector<8x128xf32> to vector<8x1xf32>
    %270 = vector.extract_strided_slice %7 {offsets = [6, 0], sizes = [1, 128], strides = [1, 1]} : vector<8x128xf32> to vector<1x128xf32>
    %271 = vector.broadcast %269 : vector<8x1xf32> to vector<8x128xf32>
    %272 = vector.broadcast %270 : vector<1x128xf32> to vector<8x128xf32>
    %273 = arith.mulf %271, %272 : vector<8x128xf32>
    %274 = arith.addf %268, %273 : vector<8x128xf32>
    %275 = vector.extract_strided_slice %226 {offsets = [0, 7], sizes = [8, 1], strides = [1, 1]} : vector<8x128xf32> to vector<8x1xf32>
    %276 = vector.extract_strided_slice %7 {offsets = [7, 0], sizes = [1, 128], strides = [1, 1]} : vector<8x128xf32> to vector<1x128xf32>
    %277 = vector.broadcast %275 : vector<8x1xf32> to vector<8x128xf32>
    %278 = vector.broadcast %276 : vector<1x128xf32> to vector<8x128xf32>
    %279 = arith.mulf %277, %278 : vector<8x128xf32>
    %280 = arith.addf %274, %279 : vector<8x128xf32>
    %281 = math.tanh %280 : vector<8x128xf32>
    %282 = arith.index_cast %230 : i32 to index
    %c0_23 = arith.constant 0 : index
    %283 = vector.load %arg7[%282, %c0_23] : memref<64x128xf32, #tpu.memory_space<vmem>>, vector<8x128xf32>
    tpu.vector_store %arg7[%282, %c0_23], %281 {strides = array<i32>} : memref<64x128xf32, #tpu.memory_space<vmem>>, vector<8x128xf32>,
    %c5_i32 = arith.constant 5 : i32
    %c8_i32_24 = arith.constant 8 : i32
    %284 = arith.muli %c5_i32, %c8_i32_24 : i32
    %285 = tpu.assume_multiple %284, 8 : i32
    %286 = arith.index_cast %285 : i32 to index
    %c0_25 = arith.constant 0 : index
    %287 = vector.load %arg7[%286, %c0_25] : memref<64x128xf32, #tpu.memory_space<vmem>>, vector<8x128xf32>
    %288 = vector.extract_strided_slice %281 {offsets = [0, 0], sizes = [8, 1], strides = [1, 1]} : vector<8x128xf32> to vector<8x1xf32>
    %289 = vector.extract_strided_slice %7 {offsets = [0, 0], sizes = [1, 128], strides = [1, 1]} : vector<8x128xf32> to vector<1x128xf32>
    %290 = vector.broadcast %288 : vector<8x1xf32> to vector<8x128xf32>
    %291 = vector.broadcast %289 : vector<1x128xf32> to vector<8x128xf32>
    %292 = arith.mulf %290, %291 : vector<8x128xf32>
    %293 = arith.addf %287, %292 : vector<8x128xf32>
    %294 = vector.extract_strided_slice %281 {offsets = [0, 1], sizes = [8, 1], strides = [1, 1]} : vector<8x128xf32> to vector<8x1xf32>
    %295 = vector.extract_strided_slice %7 {offsets = [1, 0], sizes = [1, 128], strides = [1, 1]} : vector<8x128xf32> to vector<1x128xf32>
    %296 = vector.broadcast %294 : vector<8x1xf32> to vector<8x128xf32>
    %297 = vector.broadcast %295 : vector<1x128xf32> to vector<8x128xf32>
    %298 = arith.mulf %296, %297 : vector<8x128xf32>
    %299 = arith.addf %293, %298 : vector<8x128xf32>
    %300 = vector.extract_strided_slice %281 {offsets = [0, 2], sizes = [8, 1], strides = [1, 1]} : vector<8x128xf32> to vector<8x1xf32>
    %301 = vector.extract_strided_slice %7 {offsets = [2, 0], sizes = [1, 128], strides = [1, 1]} : vector<8x128xf32> to vector<1x128xf32>
    %302 = vector.broadcast %300 : vector<8x1xf32> to vector<8x128xf32>
    %303 = vector.broadcast %301 : vector<1x128xf32> to vector<8x128xf32>
    %304 = arith.mulf %302, %303 : vector<8x128xf32>
    %305 = arith.addf %299, %304 : vector<8x128xf32>
    %306 = vector.extract_strided_slice %281 {offsets = [0, 3], sizes = [8, 1], strides = [1, 1]} : vector<8x128xf32> to vector<8x1xf32>
    %307 = vector.extract_strided_slice %7 {offsets = [3, 0], sizes = [1, 128], strides = [1, 1]} : vector<8x128xf32> to vector<1x128xf32>
    %308 = vector.broadcast %306 : vector<8x1xf32> to vector<8x128xf32>
    %309 = vector.broadcast %307 : vector<1x128xf32> to vector<8x128xf32>
    %310 = arith.mulf %308, %309 : vector<8x128xf32>
    %311 = arith.addf %305, %310 : vector<8x128xf32>
    %312 = vector.extract_strided_slice %281 {offsets = [0, 4], sizes = [8, 1], strides = [1, 1]} : vector<8x128xf32> to vector<8x1xf32>
    %313 = vector.extract_strided_slice %7 {offsets = [4, 0], sizes = [1, 128], strides = [1, 1]} : vector<8x128xf32> to vector<1x128xf32>
    %314 = vector.broadcast %312 : vector<8x1xf32> to vector<8x128xf32>
    %315 = vector.broadcast %313 : vector<1x128xf32> to vector<8x128xf32>
    %316 = arith.mulf %314, %315 : vector<8x128xf32>
    %317 = arith.addf %311, %316 : vector<8x128xf32>
    %318 = vector.extract_strided_slice %281 {offsets = [0, 5], sizes = [8, 1], strides = [1, 1]} : vector<8x128xf32> to vector<8x1xf32>
    %319 = vector.extract_strided_slice %7 {offsets = [5, 0], sizes = [1, 128], strides = [1, 1]} : vector<8x128xf32> to vector<1x128xf32>
    %320 = vector.broadcast %318 : vector<8x1xf32> to vector<8x128xf32>
    %321 = vector.broadcast %319 : vector<1x128xf32> to vector<8x128xf32>
    %322 = arith.mulf %320, %321 : vector<8x128xf32>
    %323 = arith.addf %317, %322 : vector<8x128xf32>
    %324 = vector.extract_strided_slice %281 {offsets = [0, 6], sizes = [8, 1], strides = [1, 1]} : vector<8x128xf32> to vector<8x1xf32>
    %325 = vector.extract_strided_slice %7 {offsets = [6, 0], sizes = [1, 128], strides = [1, 1]} : vector<8x128xf32> to vector<1x128xf32>
    %326 = vector.broadcast %324 : vector<8x1xf32> to vector<8x128xf32>
    %327 = vector.broadcast %325 : vector<1x128xf32> to vector<8x128xf32>
    %328 = arith.mulf %326, %327 : vector<8x128xf32>
    %329 = arith.addf %323, %328 : vector<8x128xf32>
    %330 = vector.extract_strided_slice %281 {offsets = [0, 7], sizes = [8, 1], strides = [1, 1]} : vector<8x128xf32> to vector<8x1xf32>
    %331 = vector.extract_strided_slice %7 {offsets = [7, 0], sizes = [1, 128], strides = [1, 1]} : vector<8x128xf32> to vector<1x128xf32>
    %332 = vector.broadcast %330 : vector<8x1xf32> to vector<8x128xf32>
    %333 = vector.broadcast %331 : vector<1x128xf32> to vector<8x128xf32>
    %334 = arith.mulf %332, %333 : vector<8x128xf32>
    %335 = arith.addf %329, %334 : vector<8x128xf32>
    %336 = math.tanh %335 : vector<8x128xf32>
    %337 = arith.index_cast %285 : i32 to index
    %c0_26 = arith.constant 0 : index
    %338 = vector.load %arg7[%337, %c0_26] : memref<64x128xf32, #tpu.memory_space<vmem>>, vector<8x128xf32>
    tpu.vector_store %arg7[%337, %c0_26], %336 {strides = array<i32>} : memref<64x128xf32, #tpu.memory_space<vmem>>, vector<8x128xf32>,
    %c6_i32 = arith.constant 6 : i32
    %c8_i32_27 = arith.constant 8 : i32
    %339 = arith.muli %c6_i32, %c8_i32_27 : i32
    %340 = tpu.assume_multiple %339, 8 : i32
    %341 = arith.index_cast %340 : i32 to index
    %c0_28 = arith.constant 0 : index
    %342 = vector.load %arg7[%341, %c0_28] : memref<64x128xf32, #tpu.memory_space<vmem>>, vector<8x128xf32>
    %343 = vector.extract_strided_slice %336 {offsets = [0, 0], sizes = [8, 1], strides = [1, 1]} : vector<8x128xf32> to vector<8x1xf32>
    %344 = vector.extract_strided_slice %7 {offsets = [0, 0], sizes = [1, 128], strides = [1, 1]} : vector<8x128xf32> to vector<1x128xf32>
    %345 = vector.broadcast %343 : vector<8x1xf32> to vector<8x128xf32>
    %346 = vector.broadcast %344 : vector<1x128xf32> to vector<8x128xf32>
    %347 = arith.mulf %345, %346 : vector<8x128xf32>
    %348 = arith.addf %342, %347 : vector<8x128xf32>
    %349 = vector.extract_strided_slice %336 {offsets = [0, 1], sizes = [8, 1], strides = [1, 1]} : vector<8x128xf32> to vector<8x1xf32>
    %350 = vector.extract_strided_slice %7 {offsets = [1, 0], sizes = [1, 128], strides = [1, 1]} : vector<8x128xf32> to vector<1x128xf32>
    %351 = vector.broadcast %349 : vector<8x1xf32> to vector<8x128xf32>
    %352 = vector.broadcast %350 : vector<1x128xf32> to vector<8x128xf32>
    %353 = arith.mulf %351, %352 : vector<8x128xf32>
    %354 = arith.addf %348, %353 : vector<8x128xf32>
    %355 = vector.extract_strided_slice %336 {offsets = [0, 2], sizes = [8, 1], strides = [1, 1]} : vector<8x128xf32> to vector<8x1xf32>
    %356 = vector.extract_strided_slice %7 {offsets = [2, 0], sizes = [1, 128], strides = [1, 1]} : vector<8x128xf32> to vector<1x128xf32>
    %357 = vector.broadcast %355 : vector<8x1xf32> to vector<8x128xf32>
    %358 = vector.broadcast %356 : vector<1x128xf32> to vector<8x128xf32>
    %359 = arith.mulf %357, %358 : vector<8x128xf32>
    %360 = arith.addf %354, %359 : vector<8x128xf32>
    %361 = vector.extract_strided_slice %336 {offsets = [0, 3], sizes = [8, 1], strides = [1, 1]} : vector<8x128xf32> to vector<8x1xf32>
    %362 = vector.extract_strided_slice %7 {offsets = [3, 0], sizes = [1, 128], strides = [1, 1]} : vector<8x128xf32> to vector<1x128xf32>
    %363 = vector.broadcast %361 : vector<8x1xf32> to vector<8x128xf32>
    %364 = vector.broadcast %362 : vector<1x128xf32> to vector<8x128xf32>
    %365 = arith.mulf %363, %364 : vector<8x128xf32>
    %366 = arith.addf %360, %365 : vector<8x128xf32>
    %367 = vector.extract_strided_slice %336 {offsets = [0, 4], sizes = [8, 1], strides = [1, 1]} : vector<8x128xf32> to vector<8x1xf32>
    %368 = vector.extract_strided_slice %7 {offsets = [4, 0], sizes = [1, 128], strides = [1, 1]} : vector<8x128xf32> to vector<1x128xf32>
    %369 = vector.broadcast %367 : vector<8x1xf32> to vector<8x128xf32>
    %370 = vector.broadcast %368 : vector<1x128xf32> to vector<8x128xf32>
    %371 = arith.mulf %369, %370 : vector<8x128xf32>
    %372 = arith.addf %366, %371 : vector<8x128xf32>
    %373 = vector.extract_strided_slice %336 {offsets = [0, 5], sizes = [8, 1], strides = [1, 1]} : vector<8x128xf32> to vector<8x1xf32>
    %374 = vector.extract_strided_slice %7 {offsets = [5, 0], sizes = [1, 128], strides = [1, 1]} : vector<8x128xf32> to vector<1x128xf32>
    %375 = vector.broadcast %373 : vector<8x1xf32> to vector<8x128xf32>
    %376 = vector.broadcast %374 : vector<1x128xf32> to vector<8x128xf32>
    %377 = arith.mulf %375, %376 : vector<8x128xf32>
    %378 = arith.addf %372, %377 : vector<8x128xf32>
    %379 = vector.extract_strided_slice %336 {offsets = [0, 6], sizes = [8, 1], strides = [1, 1]} : vector<8x128xf32> to vector<8x1xf32>
    %380 = vector.extract_strided_slice %7 {offsets = [6, 0], sizes = [1, 128], strides = [1, 1]} : vector<8x128xf32> to vector<1x128xf32>
    %381 = vector.broadcast %379 : vector<8x1xf32> to vector<8x128xf32>
    %382 = vector.broadcast %380 : vector<1x128xf32> to vector<8x128xf32>
    %383 = arith.mulf %381, %382 : vector<8x128xf32>
    %384 = arith.addf %378, %383 : vector<8x128xf32>
    %385 = vector.extract_strided_slice %336 {offsets = [0, 7], sizes = [8, 1], strides = [1, 1]} : vector<8x128xf32> to vector<8x1xf32>
    %386 = vector.extract_strided_slice %7 {offsets = [7, 0], sizes = [1, 128], strides = [1, 1]} : vector<8x128xf32> to vector<1x128xf32>
    %387 = vector.broadcast %385 : vector<8x1xf32> to vector<8x128xf32>
    %388 = vector.broadcast %386 : vector<1x128xf32> to vector<8x128xf32>
    %389 = arith.mulf %387, %388 : vector<8x128xf32>
    %390 = arith.addf %384, %389 : vector<8x128xf32>
    %391 = math.tanh %390 : vector<8x128xf32>
    %392 = arith.index_cast %340 : i32 to index
    %c0_29 = arith.constant 0 : index
    %393 = vector.load %arg7[%392, %c0_29] : memref<64x128xf32, #tpu.memory_space<vmem>>, vector<8x128xf32>
    tpu.vector_store %arg7[%392, %c0_29], %391 {strides = array<i32>} : memref<64x128xf32, #tpu.memory_space<vmem>>, vector<8x128xf32>,
    %c7_i32 = arith.constant 7 : i32
    %c8_i32_30 = arith.constant 8 : i32
    %394 = arith.muli %c7_i32, %c8_i32_30 : i32
    %395 = tpu.assume_multiple %394, 8 : i32
    %396 = arith.index_cast %395 : i32 to index
    %c0_31 = arith.constant 0 : index
    %397 = vector.load %arg7[%396, %c0_31] : memref<64x128xf32, #tpu.memory_space<vmem>>, vector<8x128xf32>
    %398 = vector.extract_strided_slice %391 {offsets = [0, 0], sizes = [8, 1], strides = [1, 1]} : vector<8x128xf32> to vector<8x1xf32>
    %399 = vector.extract_strided_slice %7 {offsets = [0, 0], sizes = [1, 128], strides = [1, 1]} : vector<8x128xf32> to vector<1x128xf32>
    %400 = vector.broadcast %398 : vector<8x1xf32> to vector<8x128xf32>
    %401 = vector.broadcast %399 : vector<1x128xf32> to vector<8x128xf32>
    %402 = arith.mulf %400, %401 : vector<8x128xf32>
    %403 = arith.addf %397, %402 : vector<8x128xf32>
    %404 = vector.extract_strided_slice %391 {offsets = [0, 1], sizes = [8, 1], strides = [1, 1]} : vector<8x128xf32> to vector<8x1xf32>
    %405 = vector.extract_strided_slice %7 {offsets = [1, 0], sizes = [1, 128], strides = [1, 1]} : vector<8x128xf32> to vector<1x128xf32>
    %406 = vector.broadcast %404 : vector<8x1xf32> to vector<8x128xf32>
    %407 = vector.broadcast %405 : vector<1x128xf32> to vector<8x128xf32>
    %408 = arith.mulf %406, %407 : vector<8x128xf32>
    %409 = arith.addf %403, %408 : vector<8x128xf32>
    %410 = vector.extract_strided_slice %391 {offsets = [0, 2], sizes = [8, 1], strides = [1, 1]} : vector<8x128xf32> to vector<8x1xf32>
    %411 = vector.extract_strided_slice %7 {offsets = [2, 0], sizes = [1, 128], strides = [1, 1]} : vector<8x128xf32> to vector<1x128xf32>
    %412 = vector.broadcast %410 : vector<8x1xf32> to vector<8x128xf32>
    %413 = vector.broadcast %411 : vector<1x128xf32> to vector<8x128xf32>
    %414 = arith.mulf %412, %413 : vector<8x128xf32>
    %415 = arith.addf %409, %414 : vector<8x128xf32>
    %416 = vector.extract_strided_slice %391 {offsets = [0, 3], sizes = [8, 1], strides = [1, 1]} : vector<8x128xf32> to vector<8x1xf32>
    %417 = vector.extract_strided_slice %7 {offsets = [3, 0], sizes = [1, 128], strides = [1, 1]} : vector<8x128xf32> to vector<1x128xf32>
    %418 = vector.broadcast %416 : vector<8x1xf32> to vector<8x128xf32>
    %419 = vector.broadcast %417 : vector<1x128xf32> to vector<8x128xf32>
    %420 = arith.mulf %418, %419 : vector<8x128xf32>
    %421 = arith.addf %415, %420 : vector<8x128xf32>
    %422 = vector.extract_strided_slice %391 {offsets = [0, 4], sizes = [8, 1], strides = [1, 1]} : vector<8x128xf32> to vector<8x1xf32>
    %423 = vector.extract_strided_slice %7 {offsets = [4, 0], sizes = [1, 128], strides = [1, 1]} : vector<8x128xf32> to vector<1x128xf32>
    %424 = vector.broadcast %422 : vector<8x1xf32> to vector<8x128xf32>
    %425 = vector.broadcast %423 : vector<1x128xf32> to vector<8x128xf32>
    %426 = arith.mulf %424, %425 : vector<8x128xf32>
    %427 = arith.addf %421, %426 : vector<8x128xf32>
    %428 = vector.extract_strided_slice %391 {offsets = [0, 5], sizes = [8, 1], strides = [1, 1]} : vector<8x128xf32> to vector<8x1xf32>
    %429 = vector.extract_strided_slice %7 {offsets = [5, 0], sizes = [1, 128], strides = [1, 1]} : vector<8x128xf32> to vector<1x128xf32>
    %430 = vector.broadcast %428 : vector<8x1xf32> to vector<8x128xf32>
    %431 = vector.broadcast %429 : vector<1x128xf32> to vector<8x128xf32>
    %432 = arith.mulf %430, %431 : vector<8x128xf32>
    %433 = arith.addf %427, %432 : vector<8x128xf32>
    %434 = vector.extract_strided_slice %391 {offsets = [0, 6], sizes = [8, 1], strides = [1, 1]} : vector<8x128xf32> to vector<8x1xf32>
    %435 = vector.extract_strided_slice %7 {offsets = [6, 0], sizes = [1, 128], strides = [1, 1]} : vector<8x128xf32> to vector<1x128xf32>
    %436 = vector.broadcast %434 : vector<8x1xf32> to vector<8x128xf32>
    %437 = vector.broadcast %435 : vector<1x128xf32> to vector<8x128xf32>
    %438 = arith.mulf %436, %437 : vector<8x128xf32>
    %439 = arith.addf %433, %438 : vector<8x128xf32>
    %440 = vector.extract_strided_slice %391 {offsets = [0, 7], sizes = [8, 1], strides = [1, 1]} : vector<8x128xf32> to vector<8x1xf32>
    %441 = vector.extract_strided_slice %7 {offsets = [7, 0], sizes = [1, 128], strides = [1, 1]} : vector<8x128xf32> to vector<1x128xf32>
    %442 = vector.broadcast %440 : vector<8x1xf32> to vector<8x128xf32>
    %443 = vector.broadcast %441 : vector<1x128xf32> to vector<8x128xf32>
    %444 = arith.mulf %442, %443 : vector<8x128xf32>
    %445 = arith.addf %439, %444 : vector<8x128xf32>
    %446 = math.tanh %445 : vector<8x128xf32>
    %447 = arith.index_cast %395 : i32 to index
    %c0_32 = arith.constant 0 : index
    %448 = vector.load %arg7[%447, %c0_32] : memref<64x128xf32, #tpu.memory_space<vmem>>, vector<8x128xf32>
    tpu.vector_store %arg7[%447, %c0_32], %446 {strides = array<i32>} : memref<64x128xf32, #tpu.memory_space<vmem>>, vector<8x128xf32>,
    %c8_i32_33 = arith.constant 8 : i32
    %c0_34 = arith.constant 0 : index
    %c0_35 = arith.constant 0 : index
    %449 = vector.load %arg7[%c0_34, %c0_35] : memref<64x128xf32, #tpu.memory_space<vmem>>, vector<64x128xf32>
    %c0_36 = arith.constant 0 : index
    %c0_37 = arith.constant 0 : index
    %450 = vector.load %arg4[%c0_36, %c0_37] : memref<128x128xf32, #tpu.memory_space<vmem>>, vector<128x128xf32>
    %cst_38 = arith.constant dense<0.000000e+00> : vector<64x128xf32>
    %451 = tpu.matmul %449, %450, %cst_38 {dimension_numbers = #tpu.dot_dimension_numbers<[1], [0], [0], [1], [0, 0, 1, 1], [], []>} : vector<64x128xf32>, vector<128x128xf32>, vector<64x128xf32> -> vector<64x128xf32>
    %c0_39 = arith.constant 0 : index
    %c0_40 = arith.constant 0 : index
    %452 = vector.load %arg5[%c0_39, %c0_40] : memref<1x128xf32, #tpu.memory_space<vmem>>, vector<1x128xf32>
    %453 = vector.broadcast %452 : vector<1x128xf32> to vector<64x128xf32>
    %454 = arith.addf %451, %453 : vector<64x128xf32>
    %455 = tpu.iota {dimensions = array<i32: 0>} : vector<64x128xi32>
    %c8_i32_41 = arith.constant 8 : i32
    %c0_i32_42 = arith.constant 0 : i32
    %456 = arith.cmpi eq, %c8_i32_41, %c0_i32_42 : i32
    %c1_i32_43 = arith.constant 1 : i32
    %457 = arith.select %456, %c1_i32_43, %c8_i32_41 : i32
    %458 = vector.broadcast %457 : i32 to vector<64x128xi32>
    %459 = arith.remsi %455, %458 : vector<64x128xi32>
    %c0_i32_44 = arith.constant 0 : i32
    %460 = vector.broadcast %c0_i32_44 : i32 to vector<64x128xi32>
    %461 = arith.cmpi ne, %459, %460 : vector<64x128xi32>
    %c0_i32_45 = arith.constant 0 : i32
    %462 = vector.broadcast %c0_i32_45 : i32 to vector<64x128xi32>
    %463 = arith.cmpi slt, %459, %462 : vector<64x128xi32>
    %c0_i32_46 = arith.constant 0 : i32
    %464 = arith.cmpi slt, %457, %c0_i32_46 : i32
    %465 = vector.broadcast %464 : i1 to vector<64x128xi1>
    %466 = vector.broadcast %465 : vector<64x128xi1> to vector<64x128xi1>
    %467 = arith.xori %463, %466 : vector<64x128xi1>
    %468 = arith.andi %467, %461 : vector<64x128xi1>
    %469 = vector.broadcast %457 : i32 to vector<64x128xi32>
    %470 = arith.addi %459, %469 : vector<64x128xi32>
    %471 = arith.select %468, %470, %459 : vector<64x128xi1>, vector<64x128xi32>
    %c2_i32_47 = arith.constant 2 : i32
    %472 = vector.broadcast %c2_i32_47 : i32 to vector<64x128xi32>
    %473 = arith.cmpi slt, %471, %472 : vector<64x128xi32>
    %474 = math.absf %454 : vector<64x128xf32>
    %cst_48 = arith.constant 0.000000e+00 : f32
    %475 = vector.broadcast %cst_48 : f32 to vector<64x128xf32>
    %476 = arith.select %473, %474, %475 : vector<64x128xi1>, vector<64x128xf32>
    %477 = vector.shape_cast %476 : vector<64x128xf32> to vector<1x64x128xf32>
    %cst_49 = arith.constant dense<0.000000e+00> : vector<1xf32>
    %478 = vector.multi_reduction <add>, %477, %cst_49 [1, 2] : vector<1x64x128xf32> to vector<1xf32>
    %479 = vector.shape_cast %478 : vector<1xf32> to vector<1x1x1xf32>
    %480 = vector.extract %479[0, 0, 0] : f32 from vector<1x1x1xf32>
    %481 = vector.broadcast %480 : f32 to vector<1x1xf32>
    %482 = tpu.reciprocal %481 {approx = true} : vector<1x1xf32> -> vector<1x1xf32>
    %483 = arith.mulf %481, %482 : vector<1x1xf32>
    %cst_50 = arith.constant 2.000000e+00 : f32
    %484 = vector.broadcast %cst_50 : f32 to vector<1x1xf32>
    %485 = arith.subf %484, %483 : vector<1x1xf32>
    %486 = arith.mulf %482, %485 : vector<1x1xf32>
    %487 = vector.broadcast %486 : vector<1x1xf32> to vector<64x128xf32>
    %488 = arith.mulf %476, %487 : vector<64x128xf32>
    %c0_51 = arith.constant 0 : index
    %c0_52 = arith.constant 0 : index
    %489 = vector.load %arg6[%c0_51, %c0_52] : memref<64x128xf32, #tpu.memory_space<vmem>>, vector<64x128xf32>
    tpu.vector_store %arg6[%c0_51, %c0_52], %488 {strides = array<i32>} : memref<64x128xf32, #tpu.memory_space<vmem>>, vector<64x128xf32>,
    return
  }
}

</mosaic_0001>

<llo_original>
// kernel: tpu_custom_call.1
$region0: #{tpu_custom_call.1}
  #allocation0 [shape = 'u32[]', space=smem, size = 0x4, offset = 0x4, fixed_abs, tag = 'smem constant byte address 0x4 - core index']
  #allocation1 [shape = 'u32[72,128]{1,0:T(1,128)}', space=vmem, size = 0x9000, scoped, tag = 'internal scratch']
  #allocation2 [shape = 'f32[64,128]{1,0:T(8,128)}', space=vmem, size = 0x8000, scoped, tag = 'scratch operand']
  %s0 = inlined_call_operand.vmem [shape: f32[64,16], index: 0, kind: input, shape index: {}]
  %s1 = inlined_call_operand.vmem [shape: f32[16,128], index: 1, kind: input, shape index: {}]
  %s2 = inlined_call_operand.hbm [shape: f32[128,128], index: 2, kind: input, shape index: {}]
  %s3 = inlined_call_operand.vmem [shape: f32[1,128], index: 3, kind: input, shape index: {}]
  %s4 = inlined_call_operand.hbm [shape: f32[128,128], index: 4, kind: input, shape index: {}]
  %s5 = inlined_call_operand.vmem [shape: f32[1,128], index: 5, kind: input, shape index: {}]
  %s6 = inlined_call_operand.hbm [shape: f32[64,128], index: 6, kind: output, shape index: {}]
  %s7 = sld [smem:[#allocation0]]
  $region42: #{tpu_custom_call.1} parent=0
    _
  %s9 = ssub.s32 1, %s7
  %s10 = scalar_select 0, %s9, %s7
  $region1: #{tpu_custom_call.1} parent=0
    #allocation3 [shape = 'u8[65536]{0}', space=vmem, size = 0x10000, scoped, tag = 'input window, operand 2, single buffered']
    #allocation4 [shape = 's32[1]{0}', space=sflag, size = 0x4, scoped, tag = 'scoped memory for tpu_custom_call.1']
    #allocation5 [shape = 's32[1]{0}', space=sflag, size = 0x4, scoped, tag = 'scoped memory for tpu_custom_call.1']
    #allocation6 [shape = 'u8[65536]{0}', space=vmem, size = 0x10000, scoped, tag = 'input window, operand 4, single buffered']
    #allocation7 [shape = 's32[1]{0}', space=sflag, size = 0x4, scoped, tag = 'scoped memory for tpu_custom_call.1']
    #allocation8 [shape = 'u8[32768]{0}', space=vmem, size = 0x8000, scoped, tag = 'output window, operand 0, single buffered']
    %11 = vsyncpa [#allocation4], 0
    %12 = vsyncpa [#allocation7], 0
    %13 = vsyncpa [#allocation5], 0
    // Predicated region
    $region2: #{tpu_custom_call.1} parent=1 // pred_check
      _
    $region3: #{tpu_custom_call.1} parent=1 // pred_check_branch
      %15 = sbr.rel (0) target = $region5
    $region4: #{tpu_custom_call.1} parent=1 // pred_region
      _
    $region5: #{tpu_custom_call.1} parent=1 // pred_fallthru
      _
    // Predicated region
    $region6: #{tpu_custom_call.1} parent=1 // pred_check
      _
    $region7: #{tpu_custom_call.1} parent=1 // pred_check_branch
      %17 = sbr.rel (0) target = $region9
    $region8: #{tpu_custom_call.1} parent=1 // pred_region
      _
    $region9: #{tpu_custom_call.1} parent=1 // pred_fallthru
      _
    // Predicated region
    $region10: #{tpu_custom_call.1} parent=1 // pred_check
      _
    $region11: #{tpu_custom_call.1} parent=1 // pred_check_branch
      %19 = sbr.rel (0) target = $region13
    $region12: #{tpu_custom_call.1} parent=1 // pred_region
      %21 = vsyncadd [#allocation4], 0
      %s22 = sshll.u32 %s2, 4
      %s23 = int_to_ptr.hbm [resolvable:$true] %s22
      %s24 = sshll.u32 [#allocation3], 4
      %s25 = int_to_ptr.vmem [resolvable:$true] %s24
      %30 = dma.hbm_to_vmem [thread:$0]  %s23, 2048, %s25, [#allocation4], 128, 128, 8
    $region13: #{tpu_custom_call.1} parent=1 // pred_fallthru
      _
    // Predicated region
    $region14: #{tpu_custom_call.1} parent=1 // pred_check
      _
    $region15: #{tpu_custom_call.1} parent=1 // pred_check_branch
      %32 = sbr.rel (0) target = $region17
    $region16: #{tpu_custom_call.1} parent=1 // pred_region
      _
    $region17: #{tpu_custom_call.1} parent=1 // pred_fallthru
      _
    // Predicated region
    $region18: #{tpu_custom_call.1} parent=1 // pred_check
      _
    $region19: #{tpu_custom_call.1} parent=1 // pred_check_branch
      %34 = sbr.rel (0) target = $region21
    $region20: #{tpu_custom_call.1} parent=1 // pred_region
      %36 = vsyncadd [#allocation7], 0
      %s37 = sshll.u32 %s4, 4
      %s38 = int_to_ptr.hbm [resolvable:$true] %s37
      %s39 = sshll.u32 [#allocation6], 4
      %s40 = int_to_ptr.vmem [resolvable:$true] %s39
      %45 = dma.hbm_to_vmem [thread:$0]  %s38, 2048, %s40, [#allocation7], 128, 128, 8
    $region21: #{tpu_custom_call.1} parent=1 // pred_fallthru
      _
    // Predicated region
    $region22: #{tpu_custom_call.1} parent=1 // pred_check
      _
    $region23: #{tpu_custom_call.1} parent=1 // pred_check_branch
      %47 = sbr.rel (0) target = $region25
    $region24: #{tpu_custom_call.1} parent=1 // pred_region
      _
    $region25: #{tpu_custom_call.1} parent=1 // pred_fallthru
      _
    // Predicated region
    $region26: #{tpu_custom_call.1} parent=1 // pred_check
      _
    $region27: #{tpu_custom_call.1} parent=1 // pred_check_branch
      %49 = sbr.rel (0) target = $region29
    $region28: #{tpu_custom_call.1} parent=1 // pred_region
      %51 = dma.done [#allocation4], 2048
    $region29: #{tpu_custom_call.1} parent=1 // pred_fallthru
      _
    // Predicated region
    $region30: #{tpu_custom_call.1} parent=1 // pred_check
      _
    $region31: #{tpu_custom_call.1} parent=1 // pred_check_branch
      %53 = sbr.rel (0) target = $region33
    $region32: #{tpu_custom_call.1} parent=1 // pred_region
      %55 = dma.done [#allocation7], 2048
    $region33: #{tpu_custom_call.1} parent=1 // pred_fallthru
      _
    %v56 = vld [vmem:[%s0] sm:$0xff]
    %v57 = vld [vmem:[%s0 + $0x8] sm:$0xff]
    %v58 = vld [vmem:[%s0 + $0x10] sm:$0xff]
    %v59 = vld [vmem:[%s0 + $0x18] sm:$0xff]
    %v60 = vld [vmem:[%s0 + $0x20] sm:$0xff]
    %v61 = vld [vmem:[%s0 + $0x28] sm:$0xff]
    %v62 = vld [vmem:[%s0 + $0x30] sm:$0xff]
    %v63 = vld [vmem:[%s0 + $0x38] sm:$0xff]
    %v64 = vld [vmem:[%s1] sm:$0xff]
    %v65 = vld [vmem:[%s1 + $0x8] sm:$0xff]
    %v66 = vld [vmem:[%s3] sm:$0x1]
    %v68 = vperm.slane %v66, 0
    %vm70 = vcmask 130048
    %v72 = vsel %vm70, %v56, 0
    %v75 = vsel %vm70, %v57, 0
    %v78 = vsel %vm70, %v58, 0
    %v81 = vsel %vm70, %v59, 0
    %v84 = vsel %vm70, %v60, 0
    %v87 = vsel %vm70, %v61, 0
    %v90 = vsel %vm70, %v62, 0
    %v93 = vsel %vm70, %v63, 0
    %95 = vmatpush.msra.mxu0 0.0
    %96 = vmatpush.msra.mxu0 0.0
    %97 = vmatpush.msra.mxu0 0.0
    %98 = vmatpush.msra.mxu0 0.0
    %99 = vmatpush.msra.mxu0 0.0
    %100 = vmatpush.msra.mxu0 0.0
    %101 = vmatpush.msra.mxu0 0.0
    %102 = vmatpush.msra.mxu0 0.0
    %103 = vmatpush.msra.mxu0 0.0
    %104 = vmatpush.msra.mxu0 0.0
    %105 = vmatpush.msra.mxu0 0.0
    %106 = vmatpush.msra.mxu0 0.0
    %107 = vmatpush.msra.mxu0 0.0
    %108 = vmatpush.msra.mxu0 0.0
    %109 = vmatpush.msra.mxu0 %v65
    %110 = vmatpush.msra.mxu0 %v64
    %111 = vmatmul.f32.gmra.mxu0 %v72
    %v112 = vpop.f32.mrf.mxu0
    %v113 = vadd.f32 %v68, %v112
    %114 = vmatmul.f32.gmra.mxu0 %v75
    %v115 = vpop.f32.mrf.mxu0
    %v116 = vadd.f32 %v68, %v115
    %117 = vmatmul.f32.gmra.mxu0 %v78
    %v118 = vpop.f32.mrf.mxu0
    %v119 = vadd.f32 %v68, %v118
    %120 = vmatmul.f32.gmra.mxu0 %v81
    %v121 = vpop.f32.mrf.mxu0
    %v122 = vadd.f32 %v68, %v121
    %123 = vmatmul.f32.gmra.mxu0 %v84
    %v124 = vpop.f32.mrf.mxu0
    %v125 = vadd.f32 %v68, %v124
    %126 = vmatmul.f32.gmra.mxu0 %v87
    %v127 = vpop.f32.mrf.mxu0
    %v128 = vadd.f32 %v68, %v127
    %129 = vmatmul.f32.gmra.mxu0 %v90
    %v130 = vpop.f32.mrf.mxu0
    %v131 = vadd.f32 %v68, %v130
    %132 = vmatmul.f32.gmra.mxu0 %v93
    %v133 = vpop.f32.mrf.mxu0
    %v134 = vadd.f32 %v68, %v133
    %135 = vdwg.mxu0
    %136 = vst [vmem:[#allocation2] sm:$0xff] %v113
    %137 = vst [vmem:[#allocation2 + $0x8] sm:$0xff] %v116
    %138 = vst [vmem:[#allocation2 + $0x10] sm:$0xff] %v119
    %139 = vst [vmem:[#allocation2 + $0x18] sm:$0xff] %v122
    %140 = vst [vmem:[#allocation2 + $0x20] sm:$0xff] %v125
    %141 = vst [vmem:[#allocation2 + $0x28] sm:$0xff] %v128
    %142 = vst [vmem:[#allocation2 + $0x30] sm:$0xff] %v131
    %143 = vst [vmem:[#allocation2 + $0x38] sm:$0xff] %v134
    %v144 = vld [vmem:[#allocation3] sm:$0xff]
    %v145 = vld [vmem:[#allocation2] sm:$0xff]
    %v146 = vperm.slane %v144, 0
    %v147 = vmul.f32 %v146, 0.0
    %v148 = vadd.f32 %v145, %v147
    %v149 = vperm.slane %v144, 1
    %v150 = vmul.f32 %v149, 0.0
    %v151 = vadd.f32 %v148, %v150
    %v152 = vperm.slane %v144, 2
    %v153 = vmul.f32 %v152, 0.0
    %v154 = vadd.f32 %v151, %v153
    %v155 = vperm.slane %v144, 3
    %v156 = vmul.f32 %v155, 0.0
    %v157 = vadd.f32 %v154, %v156
    %v158 = vperm.slane %v144, 4
    %v159 = vmul.f32 %v158, 0.0
    %v160 = vadd.f32 %v157, %v159
    %v161 = vperm.slane %v144, 5
    %v162 = vmul.f32 %v161, 0.0
    %v163 = vadd.f32 %v160, %v162
    %v164 = vperm.slane %v144, 6
    %v165 = vmul.f32 %v164, 0.0
    %v166 = vadd.f32 %v163, %v165
    %v167 = vperm.slane %v144, 7
    %v168 = vmul.f32 %v167, 0.0
    %v169 = vadd.f32 %v166, %v168
    %v170 = vtanh.pop %v169
    %171 = vst [vmem:[#allocation2] sm:$0xff] %v170
    %s172 = scalar_lea.vmem [#allocation2], 8
    %v173 = vld [vmem:[%s172] sm:$0xff]
    %175 = vset.pattern.permute.xlu0 0
    %176 = vperm.xlu0 %175, %v170
    %v177 = vpop.permute.xlu0 %176
    %v179 = vmul.f32 %v177, %v146
    %v180 = vadd.f32 %v173, %v179
    %181 = vset.pattern.permute.xlu0 1
    %182 = vperm.xlu0 %181, %v170
    %v183 = vpop.permute.xlu0 %182
    %v185 = vmul.f32 %v183, %v149
    %v186 = vadd.f32 %v180, %v185
    %187 = vset.pattern.permute.xlu0 2
    %188 = vperm.xlu0 %187, %v170
    %v189 = vpop.permute.xlu0 %188
    %v191 = vmul.f32 %v189, %v152
    %v192 = vadd.f32 %v186, %v191
    %193 = vset.pattern.permute.xlu0 3
    %194 = vperm.xlu0 %193, %v170
    %v195 = vpop.permute.xlu0 %194
    %v197 = vmul.f32 %v195, %v155
    %v198 = vadd.f32 %v192, %v197
    %199 = vset.pattern.permute.xlu0 4
    %200 = vperm.xlu0 %199, %v170
    %v201 = vpop.permute.xlu0 %200
    %v203 = vmul.f32 %v201, %v158
    %v204 = vadd.f32 %v198, %v203
    %205 = vset.pattern.permute.xlu0 5
    %206 = vperm.xlu0 %205, %v170
    %v207 = vpop.permute.xlu0 %206
    %v209 = vmul.f32 %v207, %v161
    %v210 = vadd.f32 %v204, %v209
    %211 = vset.pattern.permute.xlu0 6
    %212 = vperm.xlu0 %211, %v170
    %v213 = vpop.permute.xlu0 %212
    %v215 = vmul.f32 %v213, %v164
    %v216 = vadd.f32 %v210, %v215
    %217 = vset.pattern.permute.xlu0 7
    %218 = vperm.xlu0 %217, %v170
    %v219 = vpop.permute.xlu0 %218
    %v221 = vmul.f32 %v219, %v167
    %v222 = vadd.f32 %v216, %v221
    %v223 = vtanh.pop %v222
    %224 = vst [vmem:[%s172] sm:$0xff] %v223
    %s225 = scalar_lea.vmem [#allocation2], 16
    %v226 = vld [vmem:[%s225] sm:$0xff]
    %228 = vset.pattern.permute.xlu0 0
    %229 = vperm.xlu0 %228, %v223
    %v230 = vpop.permute.xlu0 %229
    %v232 = vmul.f32 %v230, %v146
    %v233 = vadd.f32 %v226, %v232
    %234 = vset.pattern.permute.xlu0 1
    %235 = vperm.xlu0 %234, %v223
    %v236 = vpop.permute.xlu0 %235
    %v238 = vmul.f32 %v236, %v149
    %v239 = vadd.f32 %v233, %v238
    %240 = vset.pattern.permute.xlu0 2
    %241 = vperm.xlu0 %240, %v223
    %v242 = vpop.permute.xlu0 %241
    %v244 = vmul.f32 %v242, %v152
    %v245 = vadd.f32 %v239, %v244
    %246 = vset.pattern.permute.xlu0 3
    %247 = vperm.xlu0 %246, %v223
    %v248 = vpop.permute.xlu0 %247
    %v250 = vmul.f32 %v248, %v155
    %v251 = vadd.f32 %v245, %v250
    %252 = vset.pattern.permute.xlu0 4
    %253 = vperm.xlu0 %252, %v223
    %v254 = vpop.permute.xlu0 %253
    %v256 = vmul.f32 %v254, %v158
    %v257 = vadd.f32 %v251, %v256
    %258 = vset.pattern.permute.xlu0 5
    %259 = vperm.xlu0 %258, %v223
    %v260 = vpop.permute.xlu0 %259
    %v262 = vmul.f32 %v260, %v161
    %v263 = vadd.f32 %v257, %v262
    %264 = vset.pattern.permute.xlu0 6
    %265 = vperm.xlu0 %264, %v223
    %v266 = vpop.permute.xlu0 %265
    %v268 = vmul.f32 %v266, %v164
    %v269 = vadd.f32 %v263, %v268
    %270 = vset.pattern.permute.xlu0 7
    %271 = vperm.xlu0 %270, %v223
    %v272 = vpop.permute.xlu0 %271
    %v274 = vmul.f32 %v272, %v167
    %v275 = vadd.f32 %v269, %v274
    %v276 = vtanh.pop %v275
    %277 = vst [vmem:[%s225] sm:$0xff] %v276
    %s278 = scalar_lea.vmem [#allocation2], 24
    %v279 = vld [vmem:[%s278] sm:$0xff]
    %281 = vset.pattern.permute.xlu0 0
    %282 = vperm.xlu0 %281, %v276
    %v283 = vpop.permute.xlu0 %282
    %v285 = vmul.f32 %v283, %v146
    %v286 = vadd.f32 %v279, %v285
    %287 = vset.pattern.permute.xlu0 1
    %288 = vperm.xlu0 %287, %v276
    %v289 = vpop.permute.xlu0 %288
    %v291 = vmul.f32 %v289, %v149
    %v292 = vadd.f32 %v286, %v291
    %293 = vset.pattern.permute.xlu0 2
    %294 = vperm.xlu0 %293, %v276
    %v295 = vpop.permute.xlu0 %294
    %v297 = vmul.f32 %v295, %v152
    %v298 = vadd.f32 %v292, %v297
    %299 = vset.pattern.permute.xlu0 3
    %300 = vperm.xlu0 %299, %v276
    %v301 = vpop.permute.xlu0 %300
    %v303 = vmul.f32 %v301, %v155
    %v304 = vadd.f32 %v298, %v303
    %305 = vset.pattern.permute.xlu0 4
    %306 = vperm.xlu0 %305, %v276
    %v307 = vpop.permute.xlu0 %306
    %v309 = vmul.f32 %v307, %v158
    %v310 = vadd.f32 %v304, %v309
    %311 = vset.pattern.permute.xlu0 5
    %312 = vperm.xlu0 %311, %v276
    %v313 = vpop.permute.xlu0 %312
    %v315 = vmul.f32 %v313, %v161
    %v316 = vadd.f32 %v310, %v315
    %317 = vset.pattern.permute.xlu0 6
    %318 = vperm.xlu0 %317, %v276
    %v319 = vpop.permute.xlu0 %318
    %v321 = vmul.f32 %v319, %v164
    %v322 = vadd.f32 %v316, %v321
    %323 = vset.pattern.permute.xlu0 7
    %324 = vperm.xlu0 %323, %v276
    %v325 = vpop.permute.xlu0 %324
    %v327 = vmul.f32 %v325, %v167
    %v328 = vadd.f32 %v322, %v327
    %v329 = vtanh.pop %v328
    %330 = vst [vmem:[%s278] sm:$0xff] %v329
    %s331 = scalar_lea.vmem [#allocation2], 32
    %v332 = vld [vmem:[%s331] sm:$0xff]
    %334 = vset.pattern.permute.xlu0 0
    %335 = vperm.xlu0 %334, %v329
    %v336 = vpop.permute.xlu0 %335
    %v338 = vmul.f32 %v336, %v146
    %v339 = vadd.f32 %v332, %v338
    %340 = vset.pattern.permute.xlu0 1
    %341 = vperm.xlu0 %340, %v329
    %v342 = vpop.permute.xlu0 %341
    %v344 = vmul.f32 %v342, %v149
    %v345 = vadd.f32 %v339, %v344
    %346 = vset.pattern.permute.xlu0 2
    %347 = vperm.xlu0 %346, %v329
    %v348 = vpop.permute.xlu0 %347
    %v350 = vmul.f32 %v348, %v152
    %v351 = vadd.f32 %v345, %v350
    %352 = vset.pattern.permute.xlu0 3
    %353 = vperm.xlu0 %352, %v329
    %v354 = vpop.permute.xlu0 %353
    %v356 = vmul.f32 %v354, %v155
    %v357 = vadd.f32 %v351, %v356
    %358 = vset.pattern.permute.xlu0 4
    %359 = vperm.xlu0 %358, %v329
    %v360 = vpop.permute.xlu0 %359
    %v362 = vmul.f32 %v360, %v158
    %v363 = vadd.f32 %v357, %v362
    %364 = vset.pattern.permute.xlu0 5
    %365 = vperm.xlu0 %364, %v329
    %v366 = vpop.permute.xlu0 %365
    %v368 = vmul.f32 %v366, %v161
    %v369 = vadd.f32 %v363, %v368
    %370 = vset.pattern.permute.xlu0 6
    %371 = vperm.xlu0 %370, %v329
    %v372 = vpop.permute.xlu0 %371
    %v374 = vmul.f32 %v372, %v164
    %v375 = vadd.f32 %v369, %v374
    %376 = vset.pattern.permute.xlu0 7
    %377 = vperm.xlu0 %376, %v329
    %v378 = vpop.permute.xlu0 %377
    %v380 = vmul.f32 %v378, %v167
    %v381 = vadd.f32 %v375, %v380
    %v382 = vtanh.pop %v381
    %383 = vst [vmem:[%s331] sm:$0xff] %v382
    %s384 = scalar_lea.vmem [#allocation2], 40
    %v385 = vld [vmem:[%s384] sm:$0xff]
    %387 = vset.pattern.permute.xlu0 0
    %388 = vperm.xlu0 %387, %v382
    %v389 = vpop.permute.xlu0 %388
    %v391 = vmul.f32 %v389, %v146
    %v392 = vadd.f32 %v385, %v391
    %393 = vset.pattern.permute.xlu0 1
    %394 = vperm.xlu0 %393, %v382
    %v395 = vpop.permute.xlu0 %394
    %v397 = vmul.f32 %v395, %v149
    %v398 = vadd.f32 %v392, %v397
    %399 = vset.pattern.permute.xlu0 2
    %400 = vperm.xlu0 %399, %v382
    %v401 = vpop.permute.xlu0 %400
    %v403 = vmul.f32 %v401, %v152
    %v404 = vadd.f32 %v398, %v403
    %405 = vset.pattern.permute.xlu0 3
    %406 = vperm.xlu0 %405, %v382
    %v407 = vpop.permute.xlu0 %406
    %v409 = vmul.f32 %v407, %v155
    %v410 = vadd.f32 %v404, %v409
    %411 = vset.pattern.permute.xlu0 4
    %412 = vperm.xlu0 %411, %v382
    %v413 = vpop.permute.xlu0 %412
    %v415 = vmul.f32 %v413, %v158
    %v416 = vadd.f32 %v410, %v415
    %417 = vset.pattern.permute.xlu0 5
    %418 = vperm.xlu0 %417, %v382
    %v419 = vpop.permute.xlu0 %418
    %v421 = vmul.f32 %v419, %v161
    %v422 = vadd.f32 %v416, %v421
    %423 = vset.pattern.permute.xlu0 6
    %424 = vperm.xlu0 %423, %v382
    %v425 = vpop.permute.xlu0 %424
    %v427 = vmul.f32 %v425, %v164
    %v428 = vadd.f32 %v422, %v427
    %429 = vset.pattern.permute.xlu0 7
    %430 = vperm.xlu0 %429, %v382
    %v431 = vpop.permute.xlu0 %430
    %v433 = vmul.f32 %v431, %v167
    %v434 = vadd.f32 %v428, %v433
    %v435 = vtanh.pop %v434
    %436 = vst [vmem:[%s384] sm:$0xff] %v435
    %s437 = scalar_lea.vmem [#allocation2], 48
    %v438 = vld [vmem:[%s437] sm:$0xff]
    %440 = vset.pattern.permute.xlu0 0
    %441 = vperm.xlu0 %440, %v435
    %v442 = vpop.permute.xlu0 %441
    %v444 = vmul.f32 %v442, %v146
    %v445 = vadd.f32 %v438, %v444
    %446 = vset.pattern.permute.xlu0 1
    %447 = vperm.xlu0 %446, %v435
    %v448 = vpop.permute.xlu0 %447
    %v450 = vmul.f32 %v448, %v149
    %v451 = vadd.f32 %v445, %v450
    %452 = vset.pattern.permute.xlu0 2
    %453 = vperm.xlu0 %452, %v435
    %v454 = vpop.permute.xlu0 %453
    %v456 = vmul.f32 %v454, %v152
    %v457 = vadd.f32 %v451, %v456
    %458 = vset.pattern.permute.xlu0 3
    %459 = vperm.xlu0 %458, %v435
    %v460 = vpop.permute.xlu0 %459
    %v462 = vmul.f32 %v460, %v155
    %v463 = vadd.f32 %v457, %v462
    %464 = vset.pattern.permute.xlu0 4
    %465 = vperm.xlu0 %464, %v435
    %v466 = vpop.permute.xlu0 %465
    %v468 = vmul.f32 %v466, %v158
    %v469 = vadd.f32 %v463, %v468
    %470 = vset.pattern.permute.xlu0 5
    %471 = vperm.xlu0 %470, %v435
    %v472 = vpop.permute.xlu0 %471
    %v474 = vmul.f32 %v472, %v161
    %v475 = vadd.f32 %v469, %v474
    %476 = vset.pattern.permute.xlu0 6
    %477 = vperm.xlu0 %476, %v435
    %v478 = vpop.permute.xlu0 %477
    %v480 = vmul.f32 %v478, %v164
    %v481 = vadd.f32 %v475, %v480
    %482 = vset.pattern.permute.xlu0 7
    %483 = vperm.xlu0 %482, %v435
    %v484 = vpop.permute.xlu0 %483
    %v486 = vmul.f32 %v484, %v167
    %v487 = vadd.f32 %v481, %v486
    %v488 = vtanh.pop %v487
    %489 = vst [vmem:[%s437] sm:$0xff] %v488
    %s490 = scalar_lea.vmem [#allocation2], 56
    %v491 = vld [vmem:[%s490] sm:$0xff]
    %493 = vset.pattern.permute.xlu0 0
    %494 = vperm.xlu0 %493, %v488
    %v495 = vpop.permute.xlu0 %494
    %v497 = vmul.f32 %v495, %v146
    %v498 = vadd.f32 %v491, %v497
    %499 = vset.pattern.permute.xlu0 1
    %500 = vperm.xlu0 %499, %v488
    %v501 = vpop.permute.xlu0 %500
    %v503 = vmul.f32 %v501, %v149
    %v504 = vadd.f32 %v498, %v503
    %505 = vset.pattern.permute.xlu0 2
    %506 = vperm.xlu0 %505, %v488
    %v507 = vpop.permute.xlu0 %506
    %v509 = vmul.f32 %v507, %v152
    %v510 = vadd.f32 %v504, %v509
    %511 = vset.pattern.permute.xlu0 3
    %512 = vperm.xlu0 %511, %v488
    %v513 = vpop.permute.xlu0 %512
    %v515 = vmul.f32 %v513, %v155
    %v516 = vadd.f32 %v510, %v515
    %517 = vset.pattern.permute.xlu0 4
    %518 = vperm.xlu0 %517, %v488
    %v519 = vpop.permute.xlu0 %518
    %v521 = vmul.f32 %v519, %v158
    %v522 = vadd.f32 %v516, %v521
    %523 = vset.pattern.permute.xlu0 5
    %524 = vperm.xlu0 %523, %v488
    %v525 = vpop.permute.xlu0 %524
    %v527 = vmul.f32 %v525, %v161
    %v528 = vadd.f32 %v522, %v527
    %529 = vset.pattern.permute.xlu0 6
    %530 = vperm.xlu0 %529, %v488
    %v531 = vpop.permute.xlu0 %530
    %v533 = vmul.f32 %v531, %v164
    %v534 = vadd.f32 %v528, %v533
    %535 = vset.pattern.permute.xlu0 7
    %536 = vperm.xlu0 %535, %v488
    %v537 = vpop.permute.xlu0 %536
    %v539 = vmul.f32 %v537, %v167
    %v540 = vadd.f32 %v534, %v539
    %v541 = vtanh.pop %v540
    %542 = vst [vmem:[%s490] sm:$0xff] %v541
    %v543 = vld [vmem:[#allocation2] sm:$0xff]
    %v544 = vld [vmem:[#allocation2 + $0x8] sm:$0xff]
    %v545 = vld [vmem:[#allocation2 + $0x10] sm:$0xff]
    %v546 = vld [vmem:[#allocation2 + $0x18] sm:$0xff]
    %v547 = vld [vmem:[#allocation2 + $0x20] sm:$0xff]
    %v548 = vld [vmem:[#allocation2 + $0x28] sm:$0xff]
    %v549 = vld [vmem:[#allocation2 + $0x30] sm:$0xff]
    %v550 = vld [vmem:[#allocation2 + $0x38] sm:$0xff]
    %v551 = vld [vmem:[#allocation6] sm:$0xff]
    %v552 = vld [vmem:[#allocation6 + $0x8] sm:$0xff]
    %v553 = vld [vmem:[#allocation6 + $0x10] sm:$0xff]
    %v554 = vld [vmem:[#allocation6 + $0x18] sm:$0xff]
    %v555 = vld [vmem:[#allocation6 + $0x20] sm:$0xff]
    %v556 = vld [vmem:[#allocation6 + $0x28] sm:$0xff]
    %v557 = vld [vmem:[#allocation6 + $0x30] sm:$0xff]
    %v558 = vld [vmem:[#allocation6 + $0x38] sm:$0xff]
    %v559 = vld [vmem:[#allocation6 + $0x40] sm:$0xff]
    %v560 = vld [vmem:[#allocation6 + $0x48] sm:$0xff]
    %v561 = vld [vmem:[#allocation6 + $0x50] sm:$0xff]
    %v562 = vld [vmem:[#allocation6 + $0x58] sm:$0xff]
    %v563 = vld [vmem:[#allocation6 + $0x60] sm:$0xff]
    %v564 = vld [vmem:[#allocation6 + $0x68] sm:$0xff]
    %v565 = vld [vmem:[#allocation6 + $0x70] sm:$0xff]
    %v566 = vld [vmem:[#allocation6 + $0x78] sm:$0xff]
    %v567 = vld [vmem:[%s5] sm:$0x1]
    %v569 = vperm.slane %v567, 0
    %571 = vmatpush.msra.mxu0 %v566
    %572 = vmatpush.msra.mxu0 %v565
    %573 = vmatpush.msra.mxu0 %v564
    %574 = vmatpush.msra.mxu0 %v563
    %575 = vmatpush.msra.mxu0 %v562
    %576 = vmatpush.msra.mxu0 %v561
    %577 = vmatpush.msra.mxu0 %v560
    %578 = vmatpush.msra.mxu0 %v559
    %579 = vmatpush.msra.mxu0 %v558
    %580 = vmatpush.msra.mxu0 %v557
    %581 = vmatpush.msra.mxu0 %v556
    %582 = vmatpush.msra.mxu0 %v555
    %583 = vmatpush.msra.mxu0 %v554
    %584 = vmatpush.msra.mxu0 %v553
    %585 = vmatpush.msra.mxu0 %v552
    %586 = vmatpush.msra.mxu0 %v551
    %587 = vmatmul.f32.gmra.mxu0 %v543
    %v588 = vpop.f32.mrf.mxu0
    %v589 = vadd.f32 %v569, %v588
    %590 = vmatmul.f32.gmra.mxu0 %v544
    %v591 = vpop.f32.mrf.mxu0
    %v592 = vadd.f32 %v569, %v591
    %593 = vmatmul.f32.gmra.mxu0 %v545
    %v594 = vpop.f32.mrf.mxu0
    %v595 = vadd.f32 %v569, %v594
    %596 = vmatmul.f32.gmra.mxu0 %v546
    %v597 = vpop.f32.mrf.mxu0
    %v598 = vadd.f32 %v569, %v597
    %599 = vmatmul.f32.gmra.mxu0 %v547
    %v600 = vpop.f32.mrf.mxu0
    %v601 = vadd.f32 %v569, %v600
    %602 = vmatmul.f32.gmra.mxu0 %v548
    %v603 = vpop.f32.mrf.mxu0
    %v604 = vadd.f32 %v569, %v603
    %605 = vmatmul.f32.gmra.mxu0 %v549
    %v606 = vpop.f32.mrf.mxu0
    %v607 = vadd.f32 %v569, %v606
    %608 = vmatmul.f32.gmra.mxu0 %v550
    %v609 = vpop.f32.mrf.mxu0
    %v610 = vadd.f32 %v569, %v609
    %611 = vdwg.mxu0
    %v612 = vlaneseq
    %v613 = vshrl.u32 %v612, 7
    %v614 = vadd.s32 %v613, 8
    %v615 = vadd.s32 %v613, 16
    %v616 = vadd.s32 %v613, 24
    %v617 = vadd.s32 %v613, 32
    %v618 = vadd.s32 %v613, 40
    %v619 = vadd.s32 %v613, 48
    %v620 = vadd.s32 %v613, 56
    %vm621 = vcmp.lt.s32.totalorder %v613, 0
    %v622 = vsub.s32 0, %v613
    %v623 = vsel %vm621, %v622, %v613
    %v624 = vshrl.u32 %v623, 3
    %v625 = vand.u32 %v623, 7
    %v626 = vsub.s32 0, %v625
    %v627 = vsel %vm621, %v626, %v625
    %vm628 = vcmp.lt.s32.totalorder %v614, 0
    %v629 = vsub.s32 0, %v614
    %v630 = vsel %vm628, %v629, %v614
    %v631 = vshrl.u32 %v630, 3
    %v632 = vand.u32 %v630, 7
    %v633 = vsub.s32 0, %v632
    %v634 = vsel %vm628, %v633, %v632
    %vm635 = vcmp.lt.s32.totalorder %v615, 0
    %v636 = vsub.s32 0, %v615
    %v637 = vsel %vm635, %v636, %v615
    %v638 = vshrl.u32 %v637, 3
    %v639 = vand.u32 %v637, 7
    %v640 = vsub.s32 0, %v639
    %v641 = vsel %vm635, %v640, %v639
    %vm642 = vcmp.lt.s32.totalorder %v616, 0
    %v643 = vsub.s32 0, %v616
    %v644 = vsel %vm642, %v643, %v616
    %v645 = vshrl.u32 %v644, 3
    %v646 = vand.u32 %v644, 7
    %v647 = vsub.s32 0, %v646
    %v648 = vsel %vm642, %v647, %v646
    %vm649 = vcmp.lt.s32.totalorder %v617, 0
    %v650 = vsub.s32 0, %v617
    %v651 = vsel %vm649, %v650, %v617
    %v652 = vshrl.u32 %v651, 3
    %v653 = vand.u32 %v651, 7
    %v654 = vsub.s32 0, %v653
    %v655 = vsel %vm649, %v654, %v653
    %vm656 = vcmp.lt.s32.totalorder %v618, 0
    %v657 = vsub.s32 0, %v618
    %v658 = vsel %vm656, %v657, %v618
    %v659 = vshrl.u32 %v658, 3
    %v660 = vand.u32 %v658, 7
    %v661 = vsub.s32 0, %v660
    %v662 = vsel %vm656, %v661, %v660
    %vm663 = vcmp.lt.s32.totalorder %v619, 0
    %v664 = vsub.s32 0, %v619
    %v665 = vsel %vm663, %v664, %v619
    %v666 = vshrl.u32 %v665, 3
    %v667 = vand.u32 %v665, 7
    %v668 = vsub.s32 0, %v667
    %v669 = vsel %vm663, %v668, %v667
    %vm670 = vcmp.lt.s32.totalorder %v620, 0
    %v671 = vsub.s32 0, %v620
    %v672 = vsel %vm670, %v671, %v620
    %v673 = vshrl.u32 %v672, 3
    %v674 = vand.u32 %v672, 7
    %v675 = vsub.s32 0, %v674
    %v676 = vsel %vm670, %v675, %v674
    %vm677 = vcmp.ne.s32.totalorder %v627, 0
    %vm678 = vcmp.ne.s32.totalorder %v634, 0
    %vm679 = vcmp.ne.s32.totalorder %v641, 0
    %vm680 = vcmp.ne.s32.totalorder %v648, 0
    %vm681 = vcmp.ne.s32.totalorder %v655, 0
    %vm682 = vcmp.ne.s32.totalorder %v662, 0
    %vm683 = vcmp.ne.s32.totalorder %v669, 0
    %vm684 = vcmp.ne.s32.totalorder %v676, 0
    %vm685 = vcmp.lt.s32.totalorder %v627, 0
    %vm686 = vcmp.lt.s32.totalorder %v634, 0
    %vm687 = vcmp.lt.s32.totalorder %v641, 0
    %vm688 = vcmp.lt.s32.totalorder %v648, 0
    %vm689 = vcmp.lt.s32.totalorder %v655, 0
    %vm690 = vcmp.lt.s32.totalorder %v662, 0
    %vm691 = vcmp.lt.s32.totalorder %v669, 0
    %vm692 = vcmp.lt.s32.totalorder %v676, 0
    %vm693 = vmand %vm685, %vm677
    %vm694 = vmand %vm686, %vm678
    %vm695 = vmand %vm687, %vm679
    %vm696 = vmand %vm688, %vm680
    %vm697 = vmand %vm689, %vm681
    %vm698 = vmand %vm690, %vm682
    %vm699 = vmand %vm691, %vm683
    %vm700 = vmand %vm692, %vm684
    %v701 = vadd.s32 %v627, 8
    %v702 = vadd.s32 %v634, 8
    %v703 = vadd.s32 %v641, 8
    %v704 = vadd.s32 %v648, 8
    %v705 = vadd.s32 %v655, 8
    %v706 = vadd.s32 %v662, 8
    %v707 = vadd.s32 %v669, 8
    %v708 = vadd.s32 %v676, 8
    %v709 = vsel %vm693, %v701, %v627
    %v710 = vsel %vm694, %v702, %v634
    %v711 = vsel %vm695, %v703, %v641
    %v712 = vsel %vm696, %v704, %v648
    %v713 = vsel %vm697, %v705, %v655
    %v714 = vsel %vm698, %v706, %v662
    %v715 = vsel %vm699, %v707, %v669
    %v716 = vsel %vm700, %v708, %v676
    %vm717 = vcmp.lt.s32.totalorder %v709, 2
    %vm718 = vcmp.lt.s32.totalorder %v710, 2
    %vm719 = vcmp.lt.s32.totalorder %v711, 2
    %vm720 = vcmp.lt.s32.totalorder %v712, 2
    %vm721 = vcmp.lt.s32.totalorder %v713, 2
    %vm722 = vcmp.lt.s32.totalorder %v714, 2
    %vm723 = vcmp.lt.s32.totalorder %v715, 2
    %vm724 = vcmp.lt.s32.totalorder %v716, 2
    %v725 = vand.u32 2147483647, %v589
    %v726 = vand.u32 2147483647, %v592
    %v727 = vand.u32 2147483647, %v595
    %v728 = vand.u32 2147483647, %v598
    %v729 = vand.u32 2147483647, %v601
    %v730 = vand.u32 2147483647, %v604
    %v731 = vand.u32 2147483647, %v607
    %v732 = vand.u32 2147483647, %v610
    %v733 = vsel %vm717, %v725, 0.0
    %v734 = vsel %vm718, %v726, 0.0
    %v735 = vsel %vm719, %v727, 0.0
    %v736 = vsel %vm720, %v728, 0.0
    %v737 = vsel %vm721, %v729, 0.0
    %v738 = vsel %vm722, %v730, 0.0
    %v739 = vsel %vm723, %v731, 0.0
    %v740 = vsel %vm724, %v732, 0.0
    %v741 = vadd.f32 %v733, %v734
    %v742 = vadd.f32 %v741, %v735
    %v743 = vadd.f32 %v742, %v736
    %v744 = vadd.f32 %v743, %v737
    %v745 = vadd.f32 %v744, %v738
    %v746 = vadd.f32 %v745, %v739
    %v747 = vadd.f32 %v746, %v740
    %748 = vadd.xlane.f32.xlu0 %v747
    %v749 = vpop.xlane.xlu0 %748
    %v750 = vrot.slane %v749, 4
    %v751 = vadd.f32 %v749, %v750
    %v752 = vrot.slane %v751, 2
    %v753 = vadd.f32 %v751, %v752
    %v754 = vrot.slane %v753, 1
    %v755 = vadd.f32 %v753, %v754
    %s756 = vtos %v755
    %v757 = vstv %s756
    %v758 = vrcp.pop %v757
    %v759 = vmul.f32 %v757, %v758
    %v760 = vsub.f32 2.0, %v759
    %v761 = vmul.f32 %v758, %v760
    %v762 = vmul.f32 %v733, %v761
    %v763 = vmul.f32 %v734, %v761
    %v764 = vmul.f32 %v735, %v761
    %v765 = vmul.f32 %v736, %v761
    %v766 = vmul.f32 %v737, %v761
    %v767 = vmul.f32 %v738, %v761
    %v768 = vmul.f32 %v739, %v761
    %v769 = vmul.f32 %v740, %v761
    %770 = vst [vmem:[#allocation8] sm:$0xff] %v762
    %771 = vst [vmem:[#allocation8 + $0x8] sm:$0xff] %v763
    %772 = vst [vmem:[#allocation8 + $0x10] sm:$0xff] %v764
    %773 = vst [vmem:[#allocation8 + $0x18] sm:$0xff] %v765
    %774 = vst [vmem:[#allocation8 + $0x20] sm:$0xff] %v766
    %775 = vst [vmem:[#allocation8 + $0x28] sm:$0xff] %v767
    %776 = vst [vmem:[#allocation8 + $0x30] sm:$0xff] %v768
    %777 = vst [vmem:[#allocation8 + $0x38] sm:$0xff] %v769
    // Predicated region
    $region34: #{tpu_custom_call.1} parent=1 // pred_check
      _
    $region35: #{tpu_custom_call.1} parent=1 // pred_check_branch
      %779 = sbr.rel (0) target = $region37
    $region36: #{tpu_custom_call.1} parent=1 // pred_region
      %781 = vsyncadd [#allocation5], 0
      %s782 = sshll.u32 [#allocation8], 4
      %s783 = int_to_ptr.vmem [resolvable:$true] %s782
      %s784 = sshll.u32 %s6, 4
      %s785 = int_to_ptr.hbm [resolvable:$true] %s784
      %790 = dma.vmem_to_hbm [thread:$0]  %s783, 1024, %s785, [#allocation5], 128, 128, 8
    $region37: #{tpu_custom_call.1} parent=1 // pred_fallthru
      _
    // Predicated region
    $region38: #{tpu_custom_call.1} parent=1 // pred_check
      _
    $region39: #{tpu_custom_call.1} parent=1 // pred_check_branch
      %792 = sbr.rel (0) target = $region41
    $region40: #{tpu_custom_call.1} parent=1 // pred_region
      %794 = dma.done [#allocation5], 1024
    $region41: #{tpu_custom_call.1} parent=1 // pred_fallthru
      _
    %795 = vsyncpa [#allocation4], 1
    %796 = vsyncpa [#allocation7], 1
    %797 = vsyncpa [#allocation5], 1

</llo_original>
